<compile_context>
chip_gen: v6e
topology: v6e:2x2x1
jax: 0.10.0
libtpu: 0.0.40
codegen_flags: <defaults>
</compile_context>

<pallas_src>
import functools
from math import floor

import jax
import jax.numpy as jnp
from jax.experimental import pallas as pl
from jax.experimental.pallas import tpu as pltpu


def conv1d_output_size(length, kernel_size=1, stride=1, padding=0, dilation=1):
    return floor((length + 2 * padding - dilation * (kernel_size - 1) - 1) / stride + 1)


def _round_up(x, m):
    return ((x + m - 1) // m) * m


# -----------------------------------------------------------------------------
# Fused Pallas kernel: conv1(GEMM)+LeakyReLU -> conv2(GEMM)+LeakyReLU -> FC+ReLU
# All intermediates stay on-chip; only the lane-dense padded output is stored.
# -----------------------------------------------------------------------------
def _fused_forward_kernel(x_ref, w1_ref, b1_ref, w2_ref, b2_ref, wfc_ref, bfc_ref, o_ref):
    prec = jax.lax.Precision.HIGHEST  # full-f32 MXU passes for parity with torch f32

    h = jnp.dot(x_ref[...], w1_ref[...], precision=prec,
                preferred_element_type=jnp.float32) + b1_ref[...]
    h = jnp.where(h > 0, h, 0.01 * h)                       # LeakyReLU (slope 0.01)

    h = jnp.dot(h, w2_ref[...], precision=prec,
                preferred_element_type=jnp.float32) + b2_ref[...]
    h = jnp.where(h > 0, h, 0.01 * h)                       # LeakyReLU

    h = jnp.dot(h, wfc_ref[...], precision=prec,
                preferred_element_type=jnp.float32) + bfc_ref[...]
    o_ref[...] = jnp.maximum(h, 0.0)                        # ReLU


@functools.partial(jax.jit, static_argnames=("out_dim",))
def conv1d_forward(prep, x, *, out_dim):
    W1, B1 = prep["W1"], prep["B1"]
    W2, B2 = prep["W2"], prep["B2"]
    WFC, BFC = prep["WFC"], prep["BFC"]

    B = x.shape[-2]
    K1, N1 = W1.shape           # (2*L, 16*L1)
    _, N2 = W2.shape            # (16*L1, 32*L2)
    _, NP = WFC.shape           # (32*L2, 128-padded out)

    # Rows per grid step: largest tile that comfortably fits VMEM on every gen
    # (per-step footprint is ~1 MiB at TB=512).  Weights are fully resident.
    TB = max(8, min(512, _round_up(B, 8)))
    Bp = _round_up(B, TB)
    xp = x if Bp == B else jnp.pad(x, ((0, Bp - B), (0, 0)))

    out = pl.pallas_call(
        _fused_forward_kernel,
        out_shape=jax.ShapeDtypeStruct((Bp, NP), jnp.float32),
        grid_spec=pltpu.PrefetchScalarGridSpec(
            num_scalar_prefetch=0,
            grid=(Bp // TB,),
            in_specs=[
                pl.BlockSpec((TB, K1), lambda i: (i, 0)),    # input rows (tiled)
                pl.BlockSpec((K1, N1), lambda i: (0, 0)),    # conv1 GEMM weight (resident)
                pl.BlockSpec((1, N1), lambda i: (0, 0)),
                pl.BlockSpec((N1, N2), lambda i: (0, 0)),    # conv2 GEMM weight (resident)
                pl.BlockSpec((1, N2), lambda i: (0, 0)),
                pl.BlockSpec((N2, NP), lambda i: (0, 0)),    # FC weight, lane-padded
                pl.BlockSpec((1, NP), lambda i: (0, 0)),
            ],
            out_specs=pl.BlockSpec((TB, NP), lambda i: (i, 0)),
        ),
        compiler_params=pltpu.CompilerParams(
            dimension_semantics=("parallel",),     # shard batch across TCs on v7x
            vmem_limit_bytes=32 * 1024 * 1024,     # tiles are tiny; safe on v5e/v6e/v7x
        ),
    )(xp, W1, B1, W2, B2, WFC, BFC)

    return out[:B, :out_dim]


# -----------------------------------------------------------------------------
# Init-time parameter preparation (done ONCE, outside the hot path)
# -----------------------------------------------------------------------------
def init_params(key, length, channel, out_dim):
    """PyTorch-default-style uniform init of the raw (torch-layout) parameters."""
    conv_1_l = conv1d_output_size(length, 8, 4)
    conv_2_l = conv1d_output_size(conv_1_l, 4, 2)
    fc_input = conv_2_l * 32
    k1, k2, k3, k4, k5, k6 = jax.random.split(key, 6)

    def uni(k, shape, fan_in):
        bound = 1.0 / float(fan_in) ** 0.5
        return jax.random.uniform(k, shape, jnp.float32, -bound, bound)

    return dict(
        w1=uni(k1, (16, channel, 8), channel * 8),   # torch Conv1d weight (OC, IC, K)
        b1=uni(k2, (16,), channel * 8),
        w2=uni(k3, (32, 16, 4), 16 * 4),
        b2=uni(k4, (32,), 16 * 4),
        wfc=uni(k5, (out_dim, fc_input), fc_input),  # torch Linear weight (out, in)
        bfc=uni(k6, (out_dim,), fc_input),
    )


def prepare_params(params, length, out_dim, lane_pad=128):
    """Fold both convs into block-sparse GEMM weights, reorder the FC weight to
    match the fused layout, and lane-pad the final layer.  All torch-layout
    reshapes/transposes happen here, once."""
    L = length
    L1 = conv1d_output_size(L, 8, 4)
    L2 = conv1d_output_size(L1, 4, 2)
    IC1, K1, OC1, S1 = 2, 8, 16, 4
    IC2, K2, OC2, S2 = 16, 4, 32, 2

    w1, b1 = params["w1"], params["b1"]
    w2, b2 = params["w2"], params["b2"]
    wfc, bfc = params["wfc"], params["bfc"]

    # conv1 as GEMM: x_flat(B, 2L) @ W1(2L, 16*L1); cols ordered [t-major, oc-minor]
    W1 = jnp.zeros((IC1 * L, OC1 * L1), jnp.float32)
    for t in range(L1):
        for c in range(IC1):
            W1 = W1.at[c * L + S1 * t: c * L + S1 * t + K1,
                       OC1 * t: OC1 * (t + 1)].set(w1[:, c, :].T)
    B1 = jnp.tile(b1, L1).reshape(1, -1)

    # conv2 as GEMM: h1(B, 16*L1) @ W2(16*L1, 32*L2); cols ordered [t2-major, oc-minor]
    W2 = jnp.zeros((OC1 * L1, OC2 * L2), jnp.float32)
    for t in range(L2):
        for k in range(K2):
            r = (S2 * t + k) * OC1
            W2 = W2.at[r: r + OC1, OC2 * t: OC2 * (t + 1)].set(w2[:, :, k].T)
    B2 = jnp.tile(b2, L2).reshape(1, -1)

    # FC: torch flattens channel-major (c*L2 + t); our h2 columns are (t*32 + c),
    # so reorder the FC weight rows accordingly and pad N to 128 lanes.
    NP = _round_up(max(out_dim, lane_pad), lane_pad)
    wfc_r = jnp.transpose(wfc.reshape(out_dim, OC2, L2), (2, 1, 0)).reshape(OC2 * L2, out_dim)
    WFC = jnp.zeros((OC2 * L2, NP), jnp.float32).at[:, :out_dim].set(wfc_r)
    BFC = jnp.zeros((1, NP), jnp.float32).at[0, :out_dim].set(bfc)

    return {"W1": W1, "B1": B1, "W2": W2, "B2": B2, "WFC": WFC, "BFC": BFC}


# -----------------------------------------------------------------------------
# Pure-JAX reference (mirrors the torch module) for an in-script sanity check.
# -----------------------------------------------------------------------------
def reference_forward(params, x, length, out_dim):
    HI = jax.lax.Precision.HIGHEST
    L = length
    L1 = conv1d_output_size(L, 8, 4)
    L2 = conv1d_output_size(L1, 4, 2)
    B = x.shape[-2]
    xc = x.reshape(B, 2, L)
    idx1 = jnp.arange(L1)[:, None] * 4 + jnp.arange(8)[None, :]
    p1 = xc[:, :, idx1]                                                     # (B,2,L1,8)
    h1 = jnp.einsum("bclk,ock->bol", p1, params["w1"], precision=HI) + params["b1"][None, :, None]
    h1 = jnp.where(h1 > 0, h1, 0.01 * h1)
    idx2 = jnp.arange(L2)[:, None] * 2 + jnp.arange(4)[None, :]
    p2 = h1[:, :, idx2]                                                     # (B,16,L2,4)
    h2 = jnp.einsum("bclk,ock->bol", p2, params["w2"], precision=HI) + params["b2"][None, :, None]
    h2 = jnp.where(h2 > 0, h2, 0.01 * h2)
    hidden = h2.reshape(B, 32 * L2)                                         # channel-major
    out = jnp.einsum("bi,oi->bo", hidden, params["wfc"], precision=HI) + params["bfc"]
    return jnp.maximum(out, 0.0)


if __name__ == "__main__":
    # forward() hard-codes 2 input channels via reshape, so channel must be 2.
    length, channel, hidden_dim, out_dim = 32, 2, 64, 8  # hidden_dim unused by the torch module
    batch = 4

    key = jax.random.PRNGKey(0)
    kp, kx = jax.random.split(key)
    params = init_params(kp, length, channel, out_dim)
    prep = prepare_params(params, length, out_dim)

    x = jax.random.normal(kx, (batch, 2 * length), dtype=jnp.float32)

    y = conv1d_forward(prep, x, out_dim=out_dim)
    jax.block_until_ready(y)

    y_ref = reference_forward(params, x, length, out_dim)
    assert y.shape == (batch, out_dim)
    assert bool(jnp.all(y >= 0.0))                       # final ReLU
    assert bool(jnp.allclose(y, y_ref, atol=1e-4, rtol=1e-4))
    print("KERNEL_OK")
</pallas_src>

<mosaic_0001>
module attributes {stable_mosaic.version = 11 : i64} {
  func.func @_fused_forward_kernel(%arg0: i32, %arg1: memref<8x64xf32, #tpu.memory_space<vmem>>, %arg2: memref<64x112xf32, #tpu.memory_space<vmem>>, %arg3: memref<1x112xf32, #tpu.memory_space<vmem>>, %arg4: memref<112x64xf32, #tpu.memory_space<vmem>>, %arg5: memref<1x64xf32, #tpu.memory_space<vmem>>, %arg6: memref<64x128xf32, #tpu.memory_space<vmem>>, %arg7: memref<1x128xf32, #tpu.memory_space<vmem>>, %arg8: memref<8x128xf32, #tpu.memory_space<vmem>>) attributes {dimension_semantics = [#tpu.dimension_semantics<parallel>], iteration_bounds = array<i64: 1>, scalar_prefetch = 0 : i64, scratch_operands = 0 : i64, tpu.core_type = #tpu.core_type<tc>, window_params = [{transform_indices = @transform_0, window_bounds = array<i64: 8, 64>}, {pipeline_mode = #tpu.pipeline_mode<synchronous>, transform_indices = @transform_1, window_bounds = array<i64: 64, 112>}, {pipeline_mode = #tpu.pipeline_mode<synchronous>, transform_indices = @transform_2, window_bounds = array<i64: 1, 112>}, {pipeline_mode = #tpu.pipeline_mode<synchronous>, transform_indices = @transform_3, window_bounds = array<i64: 112, 64>}, {pipeline_mode = #tpu.pipeline_mode<synchronous>, transform_indices = @transform_4, window_bounds = array<i64: 1, 64>}, {pipeline_mode = #tpu.pipeline_mode<synchronous>, transform_indices = @transform_5, window_bounds = array<i64: 64, 128>}, {pipeline_mode = #tpu.pipeline_mode<synchronous>, transform_indices = @transform_6, window_bounds = array<i64: 1, 128>}, {transform_indices = @transform_7, window_bounds = array<i64: 8, 128>}]} {
    %c0 = arith.constant 0 : index
    %c0_0 = arith.constant 0 : index
    %0 = vector.load %arg1[%c0, %c0_0] : memref<8x64xf32, #tpu.memory_space<vmem>>, vector<8x64xf32>
    %c0_1 = arith.constant 0 : index
    %c0_2 = arith.constant 0 : index
    %1 = vector.load %arg2[%c0_1, %c0_2] : memref<64x112xf32, #tpu.memory_space<vmem>>, vector<64x112xf32>
    %cst = arith.constant dense<0.000000e+00> : vector<8x112xf32>
    %2 = tpu.matmul %0, %1, %cst {dimension_numbers = #tpu.dot_dimension_numbers<[1], [0], [0], [1], [0, 0, 1, 1], [], []>, precision = #tpu.contract_precision<fp32>} : vector<8x64xf32>, vector<64x112xf32>, vector<8x112xf32> -> vector<8x112xf32>
    %c0_3 = arith.constant 0 : index
    %c0_4 = arith.constant 0 : index
    %3 = vector.load %arg3[%c0_3, %c0_4] : memref<1x112xf32, #tpu.memory_space<vmem>>, vector<1x112xf32>
    %4 = vector.broadcast %3 : vector<1x112xf32> to vector<8x112xf32>
    %5 = arith.addf %2, %4 : vector<8x112xf32>
    %cst_5 = arith.constant 0.000000e+00 : f32
    %6 = vector.broadcast %cst_5 : f32 to vector<8x112xf32>
    %7 = arith.cmpf ogt, %5, %6 : vector<8x112xf32>
    %cst_6 = arith.constant 0.00999999977 : f32
    %8 = vector.broadcast %cst_6 : f32 to vector<8x112xf32>
    %9 = arith.mulf %8, %5 : vector<8x112xf32>
    %10 = arith.select %7, %5, %9 : vector<8x112xi1>, vector<8x112xf32>
    %c0_7 = arith.constant 0 : index
    %c0_8 = arith.constant 0 : index
    %11 = vector.load %arg4[%c0_7, %c0_8] : memref<112x64xf32, #tpu.memory_space<vmem>>, vector<112x64xf32>
    %cst_9 = arith.constant dense<0.000000e+00> : vector<8x64xf32>
    %12 = tpu.matmul %10, %11, %cst_9 {dimension_numbers = #tpu.dot_dimension_numbers<[1], [0], [0], [1], [0, 0, 1, 1], [], []>, precision = #tpu.contract_precision<fp32>} : vector<8x112xf32>, vector<112x64xf32>, vector<8x64xf32> -> vector<8x64xf32>
    %c0_10 = arith.constant 0 : index
    %c0_11 = arith.constant 0 : index
    %13 = vector.load %arg5[%c0_10, %c0_11] : memref<1x64xf32, #tpu.memory_space<vmem>>, vector<1x64xf32>
    %14 = vector.broadcast %13 : vector<1x64xf32> to vector<8x64xf32>
    %15 = arith.addf %12, %14 : vector<8x64xf32>
    %cst_12 = arith.constant 0.000000e+00 : f32
    %16 = vector.broadcast %cst_12 : f32 to vector<8x64xf32>
    %17 = arith.cmpf ogt, %15, %16 : vector<8x64xf32>
    %cst_13 = arith.constant 0.00999999977 : f32
    %18 = vector.broadcast %cst_13 : f32 to vector<8x64xf32>
    %19 = arith.mulf %18, %15 : vector<8x64xf32>
    %20 = arith.select %17, %15, %19 : vector<8x64xi1>, vector<8x64xf32>
    %c0_14 = arith.constant 0 : index
    %c0_15 = arith.constant 0 : index
    %21 = vector.load %arg6[%c0_14, %c0_15] : memref<64x128xf32, #tpu.memory_space<vmem>>, vector<64x128xf32>
    %cst_16 = arith.constant dense<0.000000e+00> : vector<8x128xf32>
    %22 = tpu.matmul %20, %21, %cst_16 {dimension_numbers = #tpu.dot_dimension_numbers<[1], [0], [0], [1], [0, 0, 1, 1], [], []>, precision = #tpu.contract_precision<fp32>} : vector<8x64xf32>, vector<64x128xf32>, vector<8x128xf32> -> vector<8x128xf32>
    %c0_17 = arith.constant 0 : index
    %c0_18 = arith.constant 0 : index
    %23 = vector.load %arg7[%c0_17, %c0_18] : memref<1x128xf32, #tpu.memory_space<vmem>>, vector<1x128xf32>
    %24 = vector.broadcast %23 : vector<1x128xf32> to vector<8x128xf32>
    %25 = arith.addf %22, %24 : vector<8x128xf32>
    %cst_19 = arith.constant 0.000000e+00 : f32
    %26 = vector.broadcast %cst_19 : f32 to vector<8x128xf32>
    %27 = arith.maximumf %25, %26 : vector<8x128xf32>
    %c0_20 = arith.constant 0 : index
    %c0_21 = arith.constant 0 : index
    %28 = vector.load %arg8[%c0_20, %c0_21] : memref<8x128xf32, #tpu.memory_space<vmem>>, vector<8x128xf32>
    tpu.vector_store %arg8[%c0_20, %c0_21], %27 {strides = array<i32>} : memref<8x128xf32, #tpu.memory_space<vmem>>, vector<8x128xf32>,
    return
  }
  func.func @transform_0(%arg0: i32) -> (i32, i32) {
    %c0_i32 = arith.constant 0 : i32
    %c0_i32_0 = arith.constant 0 : i32
    return %arg0, %c0_i32 : i32, i32
  }
  func.func @transform_1(%arg0: i32) -> (i32, i32) {
    %c0_i32 = arith.constant 0 : i32
    %c0_i32_0 = arith.constant 0 : i32
    %c0_i32_1 = arith.constant 0 : i32
    return %c0_i32, %c0_i32_0 : i32, i32
  }
  func.func @transform_2(%arg0: i32) -> (i32, i32) {
    %c0_i32 = arith.constant 0 : i32
    %c0_i32_0 = arith.constant 0 : i32
    %c0_i32_1 = arith.constant 0 : i32
    return %c0_i32, %c0_i32_0 : i32, i32
  }
  func.func @transform_3(%arg0: i32) -> (i32, i32) {
    %c0_i32 = arith.constant 0 : i32
    %c0_i32_0 = arith.constant 0 : i32
    %c0_i32_1 = arith.constant 0 : i32
    return %c0_i32, %c0_i32_0 : i32, i32
  }
  func.func @transform_4(%arg0: i32) -> (i32, i32) {
    %c0_i32 = arith.constant 0 : i32
    %c0_i32_0 = arith.constant 0 : i32
    %c0_i32_1 = arith.constant 0 : i32
    return %c0_i32, %c0_i32_0 : i32, i32
  }
  func.func @transform_5(%arg0: i32) -> (i32, i32) {
    %c0_i32 = arith.constant 0 : i32
    %c0_i32_0 = arith.constant 0 : i32
    %c0_i32_1 = arith.constant 0 : i32
    return %c0_i32, %c0_i32_0 : i32, i32
  }
  func.func @transform_6(%arg0: i32) -> (i32, i32) {
    %c0_i32 = arith.constant 0 : i32
    %c0_i32_0 = arith.constant 0 : i32
    %c0_i32_1 = arith.constant 0 : i32
    return %c0_i32, %c0_i32_0 : i32, i32
  }
  func.func @transform_7(%arg0: i32) -> (i32, i32) {
    %c0_i32 = arith.constant 0 : i32
    %c0_i32_0 = arith.constant 0 : i32
    return %arg0, %c0_i32 : i32, i32
  }
}

</mosaic_0001>

<llo_original>
// kernel: conv1d_forward.1
$region0: #{conv1d_forward.1}
  #allocation0 [shape = 'u32[]', space=smem, size = 0x4, offset = 0x4, fixed_abs, tag = 'smem constant byte address 0x4 - core index']
  #allocation1 [shape = 'u32[144,128]{1,0:T(1,128)}', space=vmem, size = 0x12000, scoped, tag = 'internal scratch']
  %s0 = inlined_call_operand.vmem [shape: f32[8,64], index: 0, kind: input, shape index: {}]
  %s1 = inlined_call_operand.vmem [shape: f32[64,112], index: 1, kind: input, shape index: {}]
  %s2 = inlined_call_operand.vmem [shape: f32[1,112], index: 2, kind: input, shape index: {}]
  %s3 = inlined_call_operand.vmem [shape: f32[112,64], index: 3, kind: input, shape index: {}]
  %s4 = inlined_call_operand.vmem [shape: f32[1,64], index: 4, kind: input, shape index: {}]
  %s5 = inlined_call_operand.vmem [shape: f32[64,128], index: 5, kind: input, shape index: {}]
  %s6 = inlined_call_operand.vmem [shape: f32[1,128], index: 6, kind: input, shape index: {}]
  %s7 = inlined_call_operand.vmem [shape: f32[8,128], index: 7, kind: output, shape index: {}]
  %s8 = sld [smem:[#allocation0]]
  $region38: #{conv1d_forward.1} parent=0
    _
  %s10 = ssub.s32 1, %s8
  %s11 = scalar_select 0, %s10, %s8
  // Predicated region
  $region2: #{conv1d_forward.1} parent=0 // pred_check
    _
  $region3: #{conv1d_forward.1} parent=0 // pred_check_branch
    %13 = sbr.rel (0) target = $region5
  $region4: #{conv1d_forward.1} parent=0 // pred_region
    _
  $region5: #{conv1d_forward.1} parent=0 // pred_fallthru
    _
  // Predicated region
  $region6: #{conv1d_forward.1} parent=0 // pred_check
    _
  $region7: #{conv1d_forward.1} parent=0 // pred_check_branch
    %15 = sbr.rel (0) target = $region9
  $region8: #{conv1d_forward.1} parent=0 // pred_region
    _
  $region9: #{conv1d_forward.1} parent=0 // pred_fallthru
    _
  // Predicated region
  $region10: #{conv1d_forward.1} parent=0 // pred_check
    _
  $region11: #{conv1d_forward.1} parent=0 // pred_check_branch
    %17 = sbr.rel (0) target = $region13
  $region12: #{conv1d_forward.1} parent=0 // pred_region
    _
  $region13: #{conv1d_forward.1} parent=0 // pred_fallthru
    _
  // Predicated region
  $region14: #{conv1d_forward.1} parent=0 // pred_check
    _
  $region15: #{conv1d_forward.1} parent=0 // pred_check_branch
    %19 = sbr.rel (0) target = $region17
  $region16: #{conv1d_forward.1} parent=0 // pred_region
    _
  $region17: #{conv1d_forward.1} parent=0 // pred_fallthru
    _
  // Predicated region
  $region18: #{conv1d_forward.1} parent=0 // pred_check
    _
  $region19: #{conv1d_forward.1} parent=0 // pred_check_branch
    %21 = sbr.rel (0) target = $region21
  $region20: #{conv1d_forward.1} parent=0 // pred_region
    _
  $region21: #{conv1d_forward.1} parent=0 // pred_fallthru
    _
  // Predicated region
  $region22: #{conv1d_forward.1} parent=0 // pred_check
    _
  $region23: #{conv1d_forward.1} parent=0 // pred_check_branch
    %23 = sbr.rel (0) target = $region25
  $region24: #{conv1d_forward.1} parent=0 // pred_region
    _
  $region25: #{conv1d_forward.1} parent=0 // pred_fallthru
    _
  // Predicated region
  $region26: #{conv1d_forward.1} parent=0 // pred_check
    _
  $region27: #{conv1d_forward.1} parent=0 // pred_check_branch
    %25 = sbr.rel (0) target = $region29
  $region28: #{conv1d_forward.1} parent=0 // pred_region
    _
  $region29: #{conv1d_forward.1} parent=0 // pred_fallthru
    _
  %v26 = vld [vmem:[%s0] sm:$0xff]
  %v27 = vld [vmem:[%s1] sm:$0xff]
  %v28 = vld [vmem:[%s1 + $0x8] sm:$0xff]
  %v29 = vld [vmem:[%s1 + $0x10] sm:$0xff]
  %v30 = vld [vmem:[%s1 + $0x18] sm:$0xff]
  %v31 = vld [vmem:[%s1 + $0x20] sm:$0xff]
  %v32 = vld [vmem:[%s1 + $0x28] sm:$0xff]
  %v33 = vld [vmem:[%s1 + $0x30] sm:$0xff]
  %v34 = vld [vmem:[%s1 + $0x38] sm:$0xff]
  %v35 = vld [vmem:[%s2] sm:$0x1]
  %v37 = vlaneseq
  %v38 = vshrl.u32 %v37, 7
  %v39 = vsub.s32 0, %v38
  %v40 = vrot.slane %v35, %v39
  %vm42 = vcmask 523264
  %v44 = vsel %vm42, %v26, 0
  %46 = vmatprep.subr.mxu0 0.0
  %47 = vmatpush1.msra.mxu0 0.0
  %48 = vmatprep.subr.mxu0 0.0
  %49 = vmatpush1.msra.mxu0 0.0
  %50 = vmatprep.subr.mxu0 0.0
  %51 = vmatpush1.msra.mxu0 0.0
  %52 = vmatprep.subr.mxu0 0.0
  %53 = vmatpush1.msra.mxu0 0.0
  %54 = vmatprep.subr.mxu0 0.0
  %55 = vmatpush1.msra.mxu0 0.0
  %56 = vmatprep.subr.mxu0 0.0
  %57 = vmatpush1.msra.mxu0 0.0
  %58 = vmatprep.subr.mxu0 0.0
  %59 = vmatpush1.msra.mxu0 0.0
  %60 = vmatprep.subr.mxu0 0.0
  %61 = vmatpush1.msra.mxu0 0.0
  %62 = vmatprep.subr.mxu0 0.0
  %v63 = vand.u32 %v34, 4294901760
  %64 = vmatpush1.msra.mxu0 %v63
  %65 = vmatprep.subr.mxu0 0.0
  %v66 = vand.u32 %v33, 4294901760
  %67 = vmatpush1.msra.mxu0 %v66
  %68 = vmatprep.subr.mxu0 0.0
  %v69 = vand.u32 %v32, 4294901760
  %70 = vmatpush1.msra.mxu0 %v69
  %71 = vmatprep.subr.mxu0 0.0
  %v72 = vand.u32 %v31, 4294901760
  %73 = vmatpush1.msra.mxu0 %v72
  %74 = vmatprep.subr.mxu0 0.0
  %v75 = vand.u32 %v30, 4294901760
  %76 = vmatpush1.msra.mxu0 %v75
  %77 = vmatprep.subr.mxu0 0.0
  %v78 = vand.u32 %v29, 4294901760
  %79 = vmatpush1.msra.mxu0 %v78
  %80 = vmatprep.subr.mxu0 0.0
  %v81 = vand.u32 %v28, 4294901760
  %82 = vmatpush1.msra.mxu0 %v81
  %83 = vmatprep.subr.mxu0 0.0
  %v84 = vand.u32 %v27, 4294901760
  %85 = vmatpush1.msra.mxu0 %v84
  %86 = vmatprep.subr.mxu0 0.0
  %87 = vmatpush2.msra.mxu0 0.0
  %88 = vmatprep.subr.mxu0 0.0
  %89 = vmatpush2.msra.mxu0 0.0
  %90 = vmatprep.subr.mxu0 0.0
  %91 = vmatpush2.msra.mxu0 0.0
  %92 = vmatprep.subr.mxu0 0.0
  %93 = vmatpush2.msra.mxu0 0.0
  %94 = vmatprep.subr.mxu0 0.0
  %95 = vmatpush2.msra.mxu0 0.0
  %96 = vmatprep.subr.mxu0 0.0
  %97 = vmatpush2.msra.mxu0 0.0
  %98 = vmatprep.subr.mxu0 0.0
  %99 = vmatpush2.msra.mxu0 0.0
  %100 = vmatprep.subr.mxu0 0.0
  %101 = vmatpush2.msra.mxu0 0.0
  %102 = vmatprep.subr.mxu0 0.0
  %103 = vmatpush2.msra.mxu0 0.0
  %104 = vmatprep.subr.mxu0 0.0
  %105 = vmatpush2.msra.mxu0 0.0
  %106 = vmatprep.subr.mxu0 0.0
  %107 = vmatpush2.msra.mxu0 0.0
  %108 = vmatprep.subr.mxu0 0.0
  %109 = vmatpush2.msra.mxu0 0.0
  %110 = vmatprep.subr.mxu0 0.0
  %111 = vmatpush2.msra.mxu0 0.0
  %112 = vmatprep.subr.mxu0 0.0
  %113 = vmatpush2.msra.mxu0 0.0
  %114 = vmatprep.subr.mxu0 0.0
  %115 = vmatpush2.msra.mxu0 0.0
  %116 = vmatprep.subr.mxu0 0.0
  %117 = vmatpush2.msra.mxu0 0.0
  %118 = vmatprep.mubr.f32.mxu0 0.0
  %v119 = vand.u32 %v44, 4294901760
  %v120 = vsub.f32 %v44, %v119
  %v121 = vand.u32 %v120, 4294901760
  %v122 = vsub.f32 %v120, %v121
  %v123 = vand.u32 %v122, 4294901760
  %124 = vmatmul.mubr.f32.gmra.mxu0 %v123
  %v125 = vpop.f32.mrf.mxu0
  %v126 = vadd.f32 %v40, %v125
  %v127 = vpop.f32.mrf.mxu0
  %128 = vdwg.mxu0
  %129 = vmatprep.subr.mxu0 0.0
  %130 = vmatpush1.msra.mxu0 0.0
  %131 = vmatprep.subr.mxu0 0.0
  %132 = vmatpush1.msra.mxu0 0.0
  %133 = vmatprep.subr.mxu0 0.0
  %134 = vmatpush1.msra.mxu0 0.0
  %135 = vmatprep.subr.mxu0 0.0
  %136 = vmatpush1.msra.mxu0 0.0
  %137 = vmatprep.subr.mxu0 0.0
  %138 = vmatpush1.msra.mxu0 0.0
  %139 = vmatprep.subr.mxu0 0.0
  %140 = vmatpush1.msra.mxu0 0.0
  %141 = vmatprep.subr.mxu0 0.0
  %142 = vmatpush1.msra.mxu0 0.0
  %143 = vmatprep.subr.mxu0 0.0
  %144 = vmatpush1.msra.mxu0 0.0
  %145 = vmatprep.subr.mxu0 0.0
  %v146 = vand.u32 %v34, 4294901760
  %v147 = vsub.f32 %v34, %v146
  %v148 = vand.u32 %v147, 4294901760
  %v149 = vsub.f32 %v147, %v148
  %v150 = vand.u32 %v149, 4294901760
  %151 = vmatpush1.msra.mxu0 %v150
  %152 = vmatprep.subr.mxu0 0.0
  %v153 = vand.u32 %v33, 4294901760
  %v154 = vsub.f32 %v33, %v153
  %v155 = vand.u32 %v154, 4294901760
  %v156 = vsub.f32 %v154, %v155
  %v157 = vand.u32 %v156, 4294901760
  %158 = vmatpush1.msra.mxu0 %v157
  %159 = vmatprep.subr.mxu0 0.0
  %v160 = vand.u32 %v32, 4294901760
  %v161 = vsub.f32 %v32, %v160
  %v162 = vand.u32 %v161, 4294901760
  %v163 = vsub.f32 %v161, %v162
  %v164 = vand.u32 %v163, 4294901760
  %165 = vmatpush1.msra.mxu0 %v164
  %166 = vmatprep.subr.mxu0 0.0
  %v167 = vand.u32 %v31, 4294901760
  %v168 = vsub.f32 %v31, %v167
  %v169 = vand.u32 %v168, 4294901760
  %v170 = vsub.f32 %v168, %v169
  %v171 = vand.u32 %v170, 4294901760
  %172 = vmatpush1.msra.mxu0 %v171
  %173 = vmatprep.subr.mxu0 0.0
  %v174 = vand.u32 %v30, 4294901760
  %v175 = vsub.f32 %v30, %v174
  %v176 = vand.u32 %v175, 4294901760
  %v177 = vsub.f32 %v175, %v176
  %v178 = vand.u32 %v177, 4294901760
  %179 = vmatpush1.msra.mxu0 %v178
  %180 = vmatprep.subr.mxu0 0.0
  %v181 = vand.u32 %v29, 4294901760
  %v182 = vsub.f32 %v29, %v181
  %v183 = vand.u32 %v182, 4294901760
  %v184 = vsub.f32 %v182, %v183
  %v185 = vand.u32 %v184, 4294901760
  %186 = vmatpush1.msra.mxu0 %v185
  %187 = vmatprep.subr.mxu0 0.0
  %v188 = vand.u32 %v28, 4294901760
  %v189 = vsub.f32 %v28, %v188
  %v190 = vand.u32 %v189, 4294901760
  %v191 = vsub.f32 %v189, %v190
  %v192 = vand.u32 %v191, 4294901760
  %193 = vmatpush1.msra.mxu0 %v192
  %194 = vmatprep.subr.mxu0 0.0
  %v195 = vand.u32 %v27, 4294901760
  %v196 = vsub.f32 %v27, %v195
  %v197 = vand.u32 %v196, 4294901760
  %v198 = vsub.f32 %v196, %v197
  %v199 = vand.u32 %v198, 4294901760
  %200 = vmatpush1.msra.mxu0 %v199
  %201 = vmatprep.subr.mxu0 0.0
  %202 = vmatpush2.msra.mxu0 0.0
  %203 = vmatprep.subr.mxu0 0.0
  %204 = vmatpush2.msra.mxu0 0.0
  %205 = vmatprep.subr.mxu0 0.0
  %206 = vmatpush2.msra.mxu0 0.0
  %207 = vmatprep.subr.mxu0 0.0
  %208 = vmatpush2.msra.mxu0 0.0
  %209 = vmatprep.subr.mxu0 0.0
  %210 = vmatpush2.msra.mxu0 0.0
  %211 = vmatprep.subr.mxu0 0.0
  %212 = vmatpush2.msra.mxu0 0.0
  %213 = vmatprep.subr.mxu0 0.0
  %214 = vmatpush2.msra.mxu0 0.0
  %215 = vmatprep.subr.mxu0 0.0
  %216 = vmatpush2.msra.mxu0 0.0
  %217 = vmatprep.subr.mxu0 0.0
  %218 = vmatpush2.msra.mxu0 0.0
  %219 = vmatprep.subr.mxu0 0.0
  %220 = vmatpush2.msra.mxu0 0.0
  %221 = vmatprep.subr.mxu0 0.0
  %222 = vmatpush2.msra.mxu0 0.0
  %223 = vmatprep.subr.mxu0 0.0
  %224 = vmatpush2.msra.mxu0 0.0
  %225 = vmatprep.subr.mxu0 0.0
  %226 = vmatpush2.msra.mxu0 0.0
  %227 = vmatprep.subr.mxu0 0.0
  %228 = vmatpush2.msra.mxu0 0.0
  %229 = vmatprep.subr.mxu0 0.0
  %230 = vmatpush2.msra.mxu0 0.0
  %231 = vmatprep.subr.mxu0 0.0
  %232 = vmatpush2.msra.mxu0 0.0
  %233 = vmatprep.mubr.f32.mxu0 0.0
  %v234 = vand.u32 %v44, 4294901760
  %235 = vmatmul.mubr.f32.gmra.mxu0 %v234
  %v236 = vpop.f32.mrf.mxu0
  %v237 = vadd.f32 %v126, %v236
  %v238 = vpop.f32.mrf.mxu0
  %239 = vdwg.mxu0
  %240 = vmatprep.subr.mxu0 0.0
  %241 = vmatpush1.msra.mxu0 0.0
  %242 = vmatprep.subr.mxu0 0.0
  %243 = vmatpush1.msra.mxu0 0.0
  %244 = vmatprep.subr.mxu0 0.0
  %245 = vmatpush1.msra.mxu0 0.0
  %246 = vmatprep.subr.mxu0 0.0
  %247 = vmatpush1.msra.mxu0 0.0
  %248 = vmatprep.subr.mxu0 0.0
  %249 = vmatpush1.msra.mxu0 0.0
  %250 = vmatprep.subr.mxu0 0.0
  %251 = vmatpush1.msra.mxu0 0.0
  %252 = vmatprep.subr.mxu0 0.0
  %253 = vmatpush1.msra.mxu0 0.0
  %254 = vmatprep.subr.mxu0 0.0
  %255 = vmatpush1.msra.mxu0 0.0
  %256 = vmatprep.subr.mxu0 0.0
  %v257 = vand.u32 %v34, 4294901760
  %v258 = vsub.f32 %v34, %v257
  %259 = vmatpush1.msra.mxu0 %v258
  %260 = vmatprep.subr.mxu0 0.0
  %v261 = vand.u32 %v33, 4294901760
  %v262 = vsub.f32 %v33, %v261
  %263 = vmatpush1.msra.mxu0 %v262
  %264 = vmatprep.subr.mxu0 0.0
  %v265 = vand.u32 %v32, 4294901760
  %v266 = vsub.f32 %v32, %v265
  %267 = vmatpush1.msra.mxu0 %v266
  %268 = vmatprep.subr.mxu0 0.0
  %v269 = vand.u32 %v31, 4294901760
  %v270 = vsub.f32 %v31, %v269
  %271 = vmatpush1.msra.mxu0 %v270
  %272 = vmatprep.subr.mxu0 0.0
  %v273 = vand.u32 %v30, 4294901760
  %v274 = vsub.f32 %v30, %v273
  %275 = vmatpush1.msra.mxu0 %v274
  %276 = vmatprep.subr.mxu0 0.0
  %v277 = vand.u32 %v29, 4294901760
  %v278 = vsub.f32 %v29, %v277
  %279 = vmatpush1.msra.mxu0 %v278
  %280 = vmatprep.subr.mxu0 0.0
  %v281 = vand.u32 %v28, 4294901760
  %v282 = vsub.f32 %v28, %v281
  %283 = vmatpush1.msra.mxu0 %v282
  %284 = vmatprep.subr.mxu0 0.0
  %v285 = vand.u32 %v27, 4294901760
  %v286 = vsub.f32 %v27, %v285
  %287 = vmatpush1.msra.mxu0 %v286
  %288 = vmatprep.subr.mxu0 0.0
  %289 = vmatpush2.msra.mxu0 0.0
  %290 = vmatprep.subr.mxu0 0.0
  %291 = vmatpush2.msra.mxu0 0.0
  %292 = vmatprep.subr.mxu0 0.0
  %293 = vmatpush2.msra.mxu0 0.0
  %294 = vmatprep.subr.mxu0 0.0
  %295 = vmatpush2.msra.mxu0 0.0
  %296 = vmatprep.subr.mxu0 0.0
  %297 = vmatpush2.msra.mxu0 0.0
  %298 = vmatprep.subr.mxu0 0.0
  %299 = vmatpush2.msra.mxu0 0.0
  %300 = vmatprep.subr.mxu0 0.0
  %301 = vmatpush2.msra.mxu0 0.0
  %302 = vmatprep.subr.mxu0 0.0
  %303 = vmatpush2.msra.mxu0 0.0
  %304 = vmatprep.subr.mxu0 0.0
  %305 = vmatpush2.msra.mxu0 0.0
  %306 = vmatprep.subr.mxu0 0.0
  %307 = vmatpush2.msra.mxu0 0.0
  %308 = vmatprep.subr.mxu0 0.0
  %309 = vmatpush2.msra.mxu0 0.0
  %310 = vmatprep.subr.mxu0 0.0
  %311 = vmatpush2.msra.mxu0 0.0
  %312 = vmatprep.subr.mxu0 0.0
  %313 = vmatpush2.msra.mxu0 0.0
  %314 = vmatprep.subr.mxu0 0.0
  %315 = vmatpush2.msra.mxu0 0.0
  %316 = vmatprep.subr.mxu0 0.0
  %317 = vmatpush2.msra.mxu0 0.0
  %318 = vmatprep.subr.mxu0 0.0
  %319 = vmatpush2.msra.mxu0 0.0
  %320 = vmatprep.mubr.f32.mxu0 0.0
  %v321 = vand.u32 %v44, 4294901760
  %v322 = vsub.f32 %v44, %v321
  %323 = vmatmul.mubr.f32.gmra.mxu0 %v322
  %v324 = vpop.f32.mrf.mxu0
  %v325 = vadd.f32 %v237, %v324
  %v326 = vpop.f32.mrf.mxu0
  %327 = vdwg.mxu0
  %328 = vmatprep.subr.mxu0 0.0
  %329 = vmatpush1.msra.mxu0 0.0
  %330 = vmatprep.subr.mxu0 0.0
  %331 = vmatpush1.msra.mxu0 0.0
  %332 = vmatprep.subr.mxu0 0.0
  %333 = vmatpush1.msra.mxu0 0.0
  %334 = vmatprep.subr.mxu0 0.0
  %335 = vmatpush1.msra.mxu0 0.0
  %336 = vmatprep.subr.mxu0 0.0
  %337 = vmatpush1.msra.mxu0 0.0
  %338 = vmatprep.subr.mxu0 0.0
  %339 = vmatpush1.msra.mxu0 0.0
  %340 = vmatprep.subr.mxu0 0.0
  %341 = vmatpush1.msra.mxu0 0.0
  %342 = vmatprep.subr.mxu0 0.0
  %343 = vmatpush1.msra.mxu0 0.0
  %344 = vmatprep.subr.mxu0 0.0
  %v345 = vand.u32 %v34, 4294901760
  %346 = vmatpush1.msra.mxu0 %v345
  %347 = vmatprep.subr.mxu0 0.0
  %v348 = vand.u32 %v33, 4294901760
  %349 = vmatpush1.msra.mxu0 %v348
  %350 = vmatprep.subr.mxu0 0.0
  %v351 = vand.u32 %v32, 4294901760
  %352 = vmatpush1.msra.mxu0 %v351
  %353 = vmatprep.subr.mxu0 0.0
  %v354 = vand.u32 %v31, 4294901760
  %355 = vmatpush1.msra.mxu0 %v354
  %356 = vmatprep.subr.mxu0 0.0
  %v357 = vand.u32 %v30, 4294901760
  %358 = vmatpush1.msra.mxu0 %v357
  %359 = vmatprep.subr.mxu0 0.0
  %v360 = vand.u32 %v29, 4294901760
  %361 = vmatpush1.msra.mxu0 %v360
  %362 = vmatprep.subr.mxu0 0.0
  %v363 = vand.u32 %v28, 4294901760
  %364 = vmatpush1.msra.mxu0 %v363
  %365 = vmatprep.subr.mxu0 0.0
  %v366 = vand.u32 %v27, 4294901760
  %367 = vmatpush1.msra.mxu0 %v366
  %368 = vmatprep.subr.mxu0 0.0
  %369 = vmatpush2.msra.mxu0 0.0
  %370 = vmatprep.subr.mxu0 0.0
  %371 = vmatpush2.msra.mxu0 0.0
  %372 = vmatprep.subr.mxu0 0.0
  %373 = vmatpush2.msra.mxu0 0.0
  %374 = vmatprep.subr.mxu0 0.0
  %375 = vmatpush2.msra.mxu0 0.0
  %376 = vmatprep.subr.mxu0 0.0
  %377 = vmatpush2.msra.mxu0 0.0
  %378 = vmatprep.subr.mxu0 0.0
  %379 = vmatpush2.msra.mxu0 0.0
  %380 = vmatprep.subr.mxu0 0.0
  %381 = vmatpush2.msra.mxu0 0.0
  %382 = vmatprep.subr.mxu0 0.0
  %383 = vmatpush2.msra.mxu0 0.0
  %384 = vmatprep.subr.mxu0 0.0
  %385 = vmatpush2.msra.mxu0 0.0
  %386 = vmatprep.subr.mxu0 0.0
  %387 = vmatpush2.msra.mxu0 0.0
  %388 = vmatprep.subr.mxu0 0.0
  %389 = vmatpush2.msra.mxu0 0.0
  %390 = vmatprep.subr.mxu0 0.0
  %391 = vmatpush2.msra.mxu0 0.0
  %392 = vmatprep.subr.mxu0 0.0
  %393 = vmatpush2.msra.mxu0 0.0
  %394 = vmatprep.subr.mxu0 0.0
  %395 = vmatpush2.msra.mxu0 0.0
  %396 = vmatprep.subr.mxu0 0.0
  %397 = vmatpush2.msra.mxu0 0.0
  %398 = vmatprep.subr.mxu0 0.0
  %399 = vmatpush2.msra.mxu0 0.0
  %400 = vmatprep.mubr.f32.mxu0 0.0
  %v401 = vand.u32 %v44, 4294901760
  %v402 = vsub.f32 %v44, %v401
  %v403 = vand.u32 %v402, 4294901760
  %404 = vmatmul.mubr.f32.gmra.mxu0 %v403
  %v405 = vpop.f32.mrf.mxu0
  %v406 = vadd.f32 %v325, %v405
  %v407 = vpop.f32.mrf.mxu0
  %408 = vdwg.mxu0
  %409 = vmatprep.subr.mxu0 0.0
  %410 = vmatpush1.msra.mxu0 0.0
  %411 = vmatprep.subr.mxu0 0.0
  %412 = vmatpush1.msra.mxu0 0.0
  %413 = vmatprep.subr.mxu0 0.0
  %414 = vmatpush1.msra.mxu0 0.0
  %415 = vmatprep.subr.mxu0 0.0
  %416 = vmatpush1.msra.mxu0 0.0
  %417 = vmatprep.subr.mxu0 0.0
  %418 = vmatpush1.msra.mxu0 0.0
  %419 = vmatprep.subr.mxu0 0.0
  %420 = vmatpush1.msra.mxu0 0.0
  %421 = vmatprep.subr.mxu0 0.0
  %422 = vmatpush1.msra.mxu0 0.0
  %423 = vmatprep.subr.mxu0 0.0
  %424 = vmatpush1.msra.mxu0 0.0
  %425 = vmatprep.subr.mxu0 0.0
  %v426 = vand.u32 %v34, 4294901760
  %v427 = vsub.f32 %v34, %v426
  %v428 = vand.u32 %v427, 4294901760
  %429 = vmatpush1.msra.mxu0 %v428
  %430 = vmatprep.subr.mxu0 0.0
  %v431 = vand.u32 %v33, 4294901760
  %v432 = vsub.f32 %v33, %v431
  %v433 = vand.u32 %v432, 4294901760
  %434 = vmatpush1.msra.mxu0 %v433
  %435 = vmatprep.subr.mxu0 0.0
  %v436 = vand.u32 %v32, 4294901760
  %v437 = vsub.f32 %v32, %v436
  %v438 = vand.u32 %v437, 4294901760
  %439 = vmatpush1.msra.mxu0 %v438
  %440 = vmatprep.subr.mxu0 0.0
  %v441 = vand.u32 %v31, 4294901760
  %v442 = vsub.f32 %v31, %v441
  %v443 = vand.u32 %v442, 4294901760
  %444 = vmatpush1.msra.mxu0 %v443
  %445 = vmatprep.subr.mxu0 0.0
  %v446 = vand.u32 %v30, 4294901760
  %v447 = vsub.f32 %v30, %v446
  %v448 = vand.u32 %v447, 4294901760
  %449 = vmatpush1.msra.mxu0 %v448
  %450 = vmatprep.subr.mxu0 0.0
  %v451 = vand.u32 %v29, 4294901760
  %v452 = vsub.f32 %v29, %v451
  %v453 = vand.u32 %v452, 4294901760
  %454 = vmatpush1.msra.mxu0 %v453
  %455 = vmatprep.subr.mxu0 0.0
  %v456 = vand.u32 %v28, 4294901760
  %v457 = vsub.f32 %v28, %v456
  %v458 = vand.u32 %v457, 4294901760
  %459 = vmatpush1.msra.mxu0 %v458
  %460 = vmatprep.subr.mxu0 0.0
  %v461 = vand.u32 %v27, 4294901760
  %v462 = vsub.f32 %v27, %v461
  %v463 = vand.u32 %v462, 4294901760
  %464 = vmatpush1.msra.mxu0 %v463
  %465 = vmatprep.subr.mxu0 0.0
  %466 = vmatpush2.msra.mxu0 0.0
  %467 = vmatprep.subr.mxu0 0.0
  %468 = vmatpush2.msra.mxu0 0.0
  %469 = vmatprep.subr.mxu0 0.0
  %470 = vmatpush2.msra.mxu0 0.0
  %471 = vmatprep.subr.mxu0 0.0
  %472 = vmatpush2.msra.mxu0 0.0
  %473 = vmatprep.subr.mxu0 0.0
  %474 = vmatpush2.msra.mxu0 0.0
  %475 = vmatprep.subr.mxu0 0.0
  %476 = vmatpush2.msra.mxu0 0.0
  %477 = vmatprep.subr.mxu0 0.0
  %478 = vmatpush2.msra.mxu0 0.0
  %479 = vmatprep.subr.mxu0 0.0
  %480 = vmatpush2.msra.mxu0 0.0
  %481 = vmatprep.subr.mxu0 0.0
  %482 = vmatpush2.msra.mxu0 0.0
  %483 = vmatprep.subr.mxu0 0.0
  %484 = vmatpush2.msra.mxu0 0.0
  %485 = vmatprep.subr.mxu0 0.0
  %486 = vmatpush2.msra.mxu0 0.0
  %487 = vmatprep.subr.mxu0 0.0
  %488 = vmatpush2.msra.mxu0 0.0
  %489 = vmatprep.subr.mxu0 0.0
  %490 = vmatpush2.msra.mxu0 0.0
  %491 = vmatprep.subr.mxu0 0.0
  %492 = vmatpush2.msra.mxu0 0.0
  %493 = vmatprep.subr.mxu0 0.0
  %494 = vmatpush2.msra.mxu0 0.0
  %495 = vmatprep.subr.mxu0 0.0
  %496 = vmatpush2.msra.mxu0 0.0
  %497 = vmatprep.mubr.f32.mxu0 0.0
  %v498 = vand.u32 %v44, 4294901760
  %499 = vmatmul.mubr.f32.gmra.mxu0 %v498
  %v500 = vpop.f32.mrf.mxu0
  %v501 = vadd.f32 %v406, %v500
  %v502 = vpop.f32.mrf.mxu0
  %503 = vdwg.mxu0
  %504 = vmatprep.subr.mxu0 0.0
  %505 = vmatpush1.msra.mxu0 0.0
  %506 = vmatprep.subr.mxu0 0.0
  %507 = vmatpush1.msra.mxu0 0.0
  %508 = vmatprep.subr.mxu0 0.0
  %509 = vmatpush1.msra.mxu0 0.0
  %510 = vmatprep.subr.mxu0 0.0
  %511 = vmatpush1.msra.mxu0 0.0
  %512 = vmatprep.subr.mxu0 0.0
  %513 = vmatpush1.msra.mxu0 0.0
  %514 = vmatprep.subr.mxu0 0.0
  %515 = vmatpush1.msra.mxu0 0.0
  %516 = vmatprep.subr.mxu0 0.0
  %517 = vmatpush1.msra.mxu0 0.0
  %518 = vmatprep.subr.mxu0 0.0
  %519 = vmatpush1.msra.mxu0 0.0
  %520 = vmatprep.subr.mxu0 0.0
  %v521 = vand.u32 %v34, 4294901760
  %522 = vmatpush1.msra.mxu0 %v521
  %523 = vmatprep.subr.mxu0 0.0
  %v524 = vand.u32 %v33, 4294901760
  %525 = vmatpush1.msra.mxu0 %v524
  %526 = vmatprep.subr.mxu0 0.0
  %v527 = vand.u32 %v32, 4294901760
  %528 = vmatpush1.msra.mxu0 %v527
  %529 = vmatprep.subr.mxu0 0.0
  %v530 = vand.u32 %v31, 4294901760
  %531 = vmatpush1.msra.mxu0 %v530
  %532 = vmatprep.subr.mxu0 0.0
  %v533 = vand.u32 %v30, 4294901760
  %534 = vmatpush1.msra.mxu0 %v533
  %535 = vmatprep.subr.mxu0 0.0
  %v536 = vand.u32 %v29, 4294901760
  %537 = vmatpush1.msra.mxu0 %v536
  %538 = vmatprep.subr.mxu0 0.0
  %v539 = vand.u32 %v28, 4294901760
  %540 = vmatpush1.msra.mxu0 %v539
  %541 = vmatprep.subr.mxu0 0.0
  %v542 = vand.u32 %v27, 4294901760
  %543 = vmatpush1.msra.mxu0 %v542
  %544 = vmatprep.subr.mxu0 0.0
  %545 = vmatpush2.msra.mxu0 0.0
  %546 = vmatprep.subr.mxu0 0.0
  %547 = vmatpush2.msra.mxu0 0.0
  %548 = vmatprep.subr.mxu0 0.0
  %549 = vmatpush2.msra.mxu0 0.0
  %550 = vmatprep.subr.mxu0 0.0
  %551 = vmatpush2.msra.mxu0 0.0
  %552 = vmatprep.subr.mxu0 0.0
  %553 = vmatpush2.msra.mxu0 0.0
  %554 = vmatprep.subr.mxu0 0.0
  %555 = vmatpush2.msra.mxu0 0.0
  %556 = vmatprep.subr.mxu0 0.0
  %557 = vmatpush2.msra.mxu0 0.0
  %558 = vmatprep.subr.mxu0 0.0
  %559 = vmatpush2.msra.mxu0 0.0
  %560 = vmatprep.subr.mxu0 0.0
  %561 = vmatpush2.msra.mxu0 0.0
  %562 = vmatprep.subr.mxu0 0.0
  %563 = vmatpush2.msra.mxu0 0.0
  %564 = vmatprep.subr.mxu0 0.0
  %565 = vmatpush2.msra.mxu0 0.0
  %566 = vmatprep.subr.mxu0 0.0
  %567 = vmatpush2.msra.mxu0 0.0
  %568 = vmatprep.subr.mxu0 0.0
  %569 = vmatpush2.msra.mxu0 0.0
  %570 = vmatprep.subr.mxu0 0.0
  %571 = vmatpush2.msra.mxu0 0.0
  %572 = vmatprep.subr.mxu0 0.0
  %573 = vmatpush2.msra.mxu0 0.0
  %574 = vmatprep.subr.mxu0 0.0
  %575 = vmatpush2.msra.mxu0 0.0
  %576 = vmatprep.mubr.f32.mxu0 0.0
  %v577 = vand.u32 %v44, 4294901760
  %578 = vmatmul.mubr.f32.gmra.mxu0 %v577
  %v579 = vpop.f32.mrf.mxu0
  %v580 = vadd.f32 %v501, %v579
  %v581 = vpop.f32.mrf.mxu0
  %582 = vdwg.mxu0
  %vm583 = vcmp.gt.f32.partialorder %v580, 0.0
  %v584 = vmul.f32 %v580, 0.01
  %v585 = vsel %vm583, %v580, %v584
  %v586 = vld [vmem:[%s3] sm:$0xff]
  %v587 = vld [vmem:[%s3 + $0x8] sm:$0xff]
  %v588 = vld [vmem:[%s3 + $0x10] sm:$0xff]
  %v589 = vld [vmem:[%s3 + $0x18] sm:$0xff]
  %v590 = vld [vmem:[%s3 + $0x20] sm:$0xff]
  %v591 = vld [vmem:[%s3 + $0x28] sm:$0xff]
  %v592 = vld [vmem:[%s3 + $0x30] sm:$0xff]
  %v593 = vld [vmem:[%s3 + $0x38] sm:$0xff]
  %v594 = vld [vmem:[%s3 + $0x40] sm:$0xff]
  %v595 = vld [vmem:[%s3 + $0x48] sm:$0xff]
  %v596 = vld [vmem:[%s3 + $0x50] sm:$0xff]
  %v597 = vld [vmem:[%s3 + $0x58] sm:$0xff]
  %v598 = vld [vmem:[%s3 + $0x60] sm:$0xff]
  %v599 = vld [vmem:[%s3 + $0x68] sm:$0xff]
  %v600 = vld [vmem:[%s4] sm:$0x1]
  %v602 = vlaneseq
  %v603 = vshrl.u32 %v602, 7
  %v604 = vsub.s32 0, %v603
  %v605 = vrot.slane %v600, %v604
  %vm607 = vcmask 916480
  %v609 = vsel %vm607, %v585, 0
  %611 = vmatprep.subr.mxu0 0.0
  %612 = vmatpush1.msra.mxu0 0.0
  %613 = vmatprep.subr.mxu0 0.0
  %614 = vmatpush1.msra.mxu0 0.0
  %615 = vmatprep.subr.mxu0 0.0
  %v616 = vand.u32 %v599, 4294901760
  %617 = vmatpush1.msra.mxu0 %v616
  %618 = vmatprep.subr.mxu0 0.0
  %v619 = vand.u32 %v598, 4294901760
  %620 = vmatpush1.msra.mxu0 %v619
  %621 = vmatprep.subr.mxu0 0.0
  %v622 = vand.u32 %v597, 4294901760
  %623 = vmatpush1.msra.mxu0 %v622
  %624 = vmatprep.subr.mxu0 0.0
  %v625 = vand.u32 %v596, 4294901760
  %626 = vmatpush1.msra.mxu0 %v625
  %627 = vmatprep.subr.mxu0 0.0
  %v628 = vand.u32 %v595, 4294901760
  %629 = vmatpush1.msra.mxu0 %v628
  %630 = vmatprep.subr.mxu0 0.0
  %v631 = vand.u32 %v594, 4294901760
  %632 = vmatpush1.msra.mxu0 %v631
  %633 = vmatprep.subr.mxu0 0.0
  %v634 = vand.u32 %v593, 4294901760
  %635 = vmatpush1.msra.mxu0 %v634
  %636 = vmatprep.subr.mxu0 0.0
  %v637 = vand.u32 %v592, 4294901760
  %638 = vmatpush1.msra.mxu0 %v637
  %639 = vmatprep.subr.mxu0 0.0
  %v640 = vand.u32 %v591, 4294901760
  %641 = vmatpush1.msra.mxu0 %v640
  %642 = vmatprep.subr.mxu0 0.0
  %v643 = vand.u32 %v590, 4294901760
  %644 = vmatpush1.msra.mxu0 %v643
  %645 = vmatprep.subr.mxu0 0.0
  %v646 = vand.u32 %v589, 4294901760
  %647 = vmatpush1.msra.mxu0 %v646
  %648 = vmatprep.subr.mxu0 0.0
  %v649 = vand.u32 %v588, 4294901760
  %650 = vmatpush1.msra.mxu0 %v649
  %651 = vmatprep.subr.mxu0 0.0
  %v652 = vand.u32 %v587, 4294901760
  %653 = vmatpush1.msra.mxu0 %v652
  %654 = vmatprep.subr.mxu0 0.0
  %v655 = vand.u32 %v586, 4294901760
  %656 = vmatpush1.msra.mxu0 %v655
  %657 = vmatprep.subr.mxu0 0.0
  %658 = vmatpush2.msra.mxu0 0.0
  %659 = vmatprep.subr.mxu0 0.0
  %660 = vmatpush2.msra.mxu0 0.0
  %661 = vmatprep.subr.mxu0 0.0
  %662 = vmatpush2.msra.mxu0 0.0
  %663 = vmatprep.subr.mxu0 0.0
  %664 = vmatpush2.msra.mxu0 0.0
  %665 = vmatprep.subr.mxu0 0.0
  %666 = vmatpush2.msra.mxu0 0.0
  %667 = vmatprep.subr.mxu0 0.0
  %668 = vmatpush2.msra.mxu0 0.0
  %669 = vmatprep.subr.mxu0 0.0
  %670 = vmatpush2.msra.mxu0 0.0
  %671 = vmatprep.subr.mxu0 0.0
  %672 = vmatpush2.msra.mxu0 0.0
  %673 = vmatprep.subr.mxu0 0.0
  %674 = vmatpush2.msra.mxu0 0.0
  %675 = vmatprep.subr.mxu0 0.0
  %676 = vmatpush2.msra.mxu0 0.0
  %677 = vmatprep.subr.mxu0 0.0
  %678 = vmatpush2.msra.mxu0 0.0
  %679 = vmatprep.subr.mxu0 0.0
  %680 = vmatpush2.msra.mxu0 0.0
  %681 = vmatprep.subr.mxu0 0.0
  %682 = vmatpush2.msra.mxu0 0.0
  %683 = vmatprep.subr.mxu0 0.0
  %684 = vmatpush2.msra.mxu0 0.0
  %685 = vmatprep.subr.mxu0 0.0
  %686 = vmatpush2.msra.mxu0 0.0
  %687 = vmatprep.subr.mxu0 0.0
  %688 = vmatpush2.msra.mxu0 0.0
  %689 = vmatprep.mubr.f32.mxu0 0.0
  %v690 = vand.u32 %v609, 4294901760
  %v691 = vsub.f32 %v609, %v690
  %v692 = vand.u32 %v691, 4294901760
  %v693 = vsub.f32 %v691, %v692
  %v694 = vand.u32 %v693, 4294901760
  %695 = vmatmul.mubr.f32.gmra.mxu0 %v694
  %v696 = vpop.f32.mrf.mxu0
  %v697 = vadd.f32 %v605, %v696
  %v698 = vpop.f32.mrf.mxu0
  %699 = vdwg.mxu0
  %700 = vmatprep.subr.mxu0 0.0
  %701 = vmatpush1.msra.mxu0 0.0
  %702 = vmatprep.subr.mxu0 0.0
  %703 = vmatpush1.msra.mxu0 0.0
  %704 = vmatprep.subr.mxu0 0.0
  %v705 = vand.u32 %v599, 4294901760
  %v706 = vsub.f32 %v599, %v705
  %v707 = vand.u32 %v706, 4294901760
  %v708 = vsub.f32 %v706, %v707
  %v709 = vand.u32 %v708, 4294901760
  %710 = vmatpush1.msra.mxu0 %v709
  %711 = vmatprep.subr.mxu0 0.0
  %v712 = vand.u32 %v598, 4294901760
  %v713 = vsub.f32 %v598, %v712
  %v714 = vand.u32 %v713, 4294901760
  %v715 = vsub.f32 %v713, %v714
  %v716 = vand.u32 %v715, 4294901760
  %717 = vmatpush1.msra.mxu0 %v716
  %718 = vmatprep.subr.mxu0 0.0
  %v719 = vand.u32 %v597, 4294901760
  %v720 = vsub.f32 %v597, %v719
  %v721 = vand.u32 %v720, 4294901760
  %v722 = vsub.f32 %v720, %v721
  %v723 = vand.u32 %v722, 4294901760
  %724 = vmatpush1.msra.mxu0 %v723
  %725 = vmatprep.subr.mxu0 0.0
  %v726 = vand.u32 %v596, 4294901760
  %v727 = vsub.f32 %v596, %v726
  %v728 = vand.u32 %v727, 4294901760
  %v729 = vsub.f32 %v727, %v728
  %v730 = vand.u32 %v729, 4294901760
  %731 = vmatpush1.msra.mxu0 %v730
  %732 = vmatprep.subr.mxu0 0.0
  %v733 = vand.u32 %v595, 4294901760
  %v734 = vsub.f32 %v595, %v733
  %v735 = vand.u32 %v734, 4294901760
  %v736 = vsub.f32 %v734, %v735
  %v737 = vand.u32 %v736, 4294901760
  %738 = vmatpush1.msra.mxu0 %v737
  %739 = vmatprep.subr.mxu0 0.0
  %v740 = vand.u32 %v594, 4294901760
  %v741 = vsub.f32 %v594, %v740
  %v742 = vand.u32 %v741, 4294901760
  %v743 = vsub.f32 %v741, %v742
  %v744 = vand.u32 %v743, 4294901760
  %745 = vmatpush1.msra.mxu0 %v744
  %746 = vmatprep.subr.mxu0 0.0
  %v747 = vand.u32 %v593, 4294901760
  %v748 = vsub.f32 %v593, %v747
  %v749 = vand.u32 %v748, 4294901760
  %v750 = vsub.f32 %v748, %v749
  %v751 = vand.u32 %v750, 4294901760
  %752 = vmatpush1.msra.mxu0 %v751
  %753 = vmatprep.subr.mxu0 0.0
  %v754 = vand.u32 %v592, 4294901760
  %v755 = vsub.f32 %v592, %v754
  %v756 = vand.u32 %v755, 4294901760
  %v757 = vsub.f32 %v755, %v756
  %v758 = vand.u32 %v757, 4294901760
  %759 = vmatpush1.msra.mxu0 %v758
  %760 = vmatprep.subr.mxu0 0.0
  %v761 = vand.u32 %v591, 4294901760
  %v762 = vsub.f32 %v591, %v761
  %v763 = vand.u32 %v762, 4294901760
  %v764 = vsub.f32 %v762, %v763
  %v765 = vand.u32 %v764, 4294901760
  %766 = vmatpush1.msra.mxu0 %v765
  %767 = vmatprep.subr.mxu0 0.0
  %v768 = vand.u32 %v590, 4294901760
  %v769 = vsub.f32 %v590, %v768
  %v770 = vand.u32 %v769, 4294901760
  %v771 = vsub.f32 %v769, %v770
  %v772 = vand.u32 %v771, 4294901760
  %773 = vmatpush1.msra.mxu0 %v772
  %774 = vmatprep.subr.mxu0 0.0
  %v775 = vand.u32 %v589, 4294901760
  %v776 = vsub.f32 %v589, %v775
  %v777 = vand.u32 %v776, 4294901760
  %v778 = vsub.f32 %v776, %v777
  %v779 = vand.u32 %v778, 4294901760
  %780 = vmatpush1.msra.mxu0 %v779
  %781 = vmatprep.subr.mxu0 0.0
  %v782 = vand.u32 %v588, 4294901760
  %v783 = vsub.f32 %v588, %v782
  %v784 = vand.u32 %v783, 4294901760
  %v785 = vsub.f32 %v783, %v784
  %v786 = vand.u32 %v785, 4294901760
  %787 = vmatpush1.msra.mxu0 %v786
  %788 = vmatprep.subr.mxu0 0.0
  %v789 = vand.u32 %v587, 4294901760
  %v790 = vsub.f32 %v587, %v789
  %v791 = vand.u32 %v790, 4294901760
  %v792 = vsub.f32 %v790, %v791
  %v793 = vand.u32 %v792, 4294901760
  %794 = vmatpush1.msra.mxu0 %v793
  %795 = vmatprep.subr.mxu0 0.0
  %v796 = vand.u32 %v586, 4294901760
  %v797 = vsub.f32 %v586, %v796
  %v798 = vand.u32 %v797, 4294901760
  %v799 = vsub.f32 %v797, %v798
  %v800 = vand.u32 %v799, 4294901760
  %801 = vmatpush1.msra.mxu0 %v800
  %802 = vmatprep.subr.mxu0 0.0
  %803 = vmatpush2.msra.mxu0 0.0
  %804 = vmatprep.subr.mxu0 0.0
  %805 = vmatpush2.msra.mxu0 0.0
  %806 = vmatprep.subr.mxu0 0.0
  %807 = vmatpush2.msra.mxu0 0.0
  %808 = vmatprep.subr.mxu0 0.0
  %809 = vmatpush2.msra.mxu0 0.0
  %810 = vmatprep.subr.mxu0 0.0
  %811 = vmatpush2.msra.mxu0 0.0
  %812 = vmatprep.subr.mxu0 0.0
  %813 = vmatpush2.msra.mxu0 0.0
  %814 = vmatprep.subr.mxu0 0.0
  %815 = vmatpush2.msra.mxu0 0.0
  %816 = vmatprep.subr.mxu0 0.0
  %817 = vmatpush2.msra.mxu0 0.0
  %818 = vmatprep.subr.mxu0 0.0
  %819 = vmatpush2.msra.mxu0 0.0
  %820 = vmatprep.subr.mxu0 0.0
  %821 = vmatpush2.msra.mxu0 0.0
  %822 = vmatprep.subr.mxu0 0.0
  %823 = vmatpush2.msra.mxu0 0.0
  %824 = vmatprep.subr.mxu0 0.0
  %825 = vmatpush2.msra.mxu0 0.0
  %826 = vmatprep.subr.mxu0 0.0
  %827 = vmatpush2.msra.mxu0 0.0
  %828 = vmatprep.subr.mxu0 0.0
  %829 = vmatpush2.msra.mxu0 0.0
  %830 = vmatprep.subr.mxu0 0.0
  %831 = vmatpush2.msra.mxu0 0.0
  %832 = vmatprep.subr.mxu0 0.0
  %833 = vmatpush2.msra.mxu0 0.0
  %834 = vmatprep.mubr.f32.mxu0 0.0
  %v835 = vand.u32 %v609, 4294901760
  %836 = vmatmul.mubr.f32.gmra.mxu0 %v835
  %v837 = vpop.f32.mrf.mxu0
  %v838 = vadd.f32 %v697, %v837
  %v839 = vpop.f32.mrf.mxu0
  %840 = vdwg.mxu0
  %841 = vmatprep.subr.mxu0 0.0
  %842 = vmatpush1.msra.mxu0 0.0
  %843 = vmatprep.subr.mxu0 0.0
  %844 = vmatpush1.msra.mxu0 0.0
  %845 = vmatprep.subr.mxu0 0.0
  %v846 = vand.u32 %v599, 4294901760
  %v847 = vsub.f32 %v599, %v846
  %848 = vmatpush1.msra.mxu0 %v847
  %849 = vmatprep.subr.mxu0 0.0
  %v850 = vand.u32 %v598, 4294901760
  %v851 = vsub.f32 %v598, %v850
  %852 = vmatpush1.msra.mxu0 %v851
  %853 = vmatprep.subr.mxu0 0.0
  %v854 = vand.u32 %v597, 4294901760
  %v855 = vsub.f32 %v597, %v854
  %856 = vmatpush1.msra.mxu0 %v855
  %857 = vmatprep.subr.mxu0 0.0
  %v858 = vand.u32 %v596, 4294901760
  %v859 = vsub.f32 %v596, %v858
  %860 = vmatpush1.msra.mxu0 %v859
  %861 = vmatprep.subr.mxu0 0.0
  %v862 = vand.u32 %v595, 4294901760
  %v863 = vsub.f32 %v595, %v862
  %864 = vmatpush1.msra.mxu0 %v863
  %865 = vmatprep.subr.mxu0 0.0
  %v866 = vand.u32 %v594, 4294901760
  %v867 = vsub.f32 %v594, %v866
  %868 = vmatpush1.msra.mxu0 %v867
  %869 = vmatprep.subr.mxu0 0.0
  %v870 = vand.u32 %v593, 4294901760
  %v871 = vsub.f32 %v593, %v870
  %872 = vmatpush1.msra.mxu0 %v871
  %873 = vmatprep.subr.mxu0 0.0
  %v874 = vand.u32 %v592, 4294901760
  %v875 = vsub.f32 %v592, %v874
  %876 = vmatpush1.msra.mxu0 %v875
  %877 = vmatprep.subr.mxu0 0.0
  %v878 = vand.u32 %v591, 4294901760
  %v879 = vsub.f32 %v591, %v878
  %880 = vmatpush1.msra.mxu0 %v879
  %881 = vmatprep.subr.mxu0 0.0
  %v882 = vand.u32 %v590, 4294901760
  %v883 = vsub.f32 %v590, %v882
  %884 = vmatpush1.msra.mxu0 %v883
  %885 = vmatprep.subr.mxu0 0.0
  %v886 = vand.u32 %v589, 4294901760
  %v887 = vsub.f32 %v589, %v886
  %888 = vmatpush1.msra.mxu0 %v887
  %889 = vmatprep.subr.mxu0 0.0
  %v890 = vand.u32 %v588, 4294901760
  %v891 = vsub.f32 %v588, %v890
  %892 = vmatpush1.msra.mxu0 %v891
  %893 = vmatprep.subr.mxu0 0.0
  %v894 = vand.u32 %v587, 4294901760
  %v895 = vsub.f32 %v587, %v894
  %896 = vmatpush1.msra.mxu0 %v895
  %897 = vmatprep.subr.mxu0 0.0
  %v898 = vand.u32 %v586, 4294901760
  %v899 = vsub.f32 %v586, %v898
  %900 = vmatpush1.msra.mxu0 %v899
  %901 = vmatprep.subr.mxu0 0.0
  %902 = vmatpush2.msra.mxu0 0.0
  %903 = vmatprep.subr.mxu0 0.0
  %904 = vmatpush2.msra.mxu0 0.0
  %905 = vmatprep.subr.mxu0 0.0
  %906 = vmatpush2.msra.mxu0 0.0
  %907 = vmatprep.subr.mxu0 0.0
  %908 = vmatpush2.msra.mxu0 0.0
  %909 = vmatprep.subr.mxu0 0.0
  %910 = vmatpush2.msra.mxu0 0.0
  %911 = vmatprep.subr.mxu0 0.0
  %912 = vmatpush2.msra.mxu0 0.0
  %913 = vmatprep.subr.mxu0 0.0
  %914 = vmatpush2.msra.mxu0 0.0
  %915 = vmatprep.subr.mxu0 0.0
  %916 = vmatpush2.msra.mxu0 0.0
  %917 = vmatprep.subr.mxu0 0.0
  %918 = vmatpush2.msra.mxu0 0.0
  %919 = vmatprep.subr.mxu0 0.0
  %920 = vmatpush2.msra.mxu0 0.0
  %921 = vmatprep.subr.mxu0 0.0
  %922 = vmatpush2.msra.mxu0 0.0
  %923 = vmatprep.subr.mxu0 0.0
  %924 = vmatpush2.msra.mxu0 0.0
  %925 = vmatprep.subr.mxu0 0.0
  %926 = vmatpush2.msra.mxu0 0.0
  %927 = vmatprep.subr.mxu0 0.0
  %928 = vmatpush2.msra.mxu0 0.0
  %929 = vmatprep.subr.mxu0 0.0
  %930 = vmatpush2.msra.mxu0 0.0
  %931 = vmatprep.subr.mxu0 0.0
  %932 = vmatpush2.msra.mxu0 0.0
  %933 = vmatprep.mubr.f32.mxu0 0.0
  %v934 = vand.u32 %v609, 4294901760
  %v935 = vsub.f32 %v609, %v934
  %936 = vmatmul.mubr.f32.gmra.mxu0 %v935
  %v937 = vpop.f32.mrf.mxu0
  %v938 = vadd.f32 %v838, %v937
  %v939 = vpop.f32.mrf.mxu0
  %940 = vdwg.mxu0
  %941 = vmatprep.subr.mxu0 0.0
  %942 = vmatpush1.msra.mxu0 0.0
  %943 = vmatprep.subr.mxu0 0.0
  %944 = vmatpush1.msra.mxu0 0.0
  %945 = vmatprep.subr.mxu0 0.0
  %v946 = vand.u32 %v599, 4294901760
  %947 = vmatpush1.msra.mxu0 %v946
  %948 = vmatprep.subr.mxu0 0.0
  %v949 = vand.u32 %v598, 4294901760
  %950 = vmatpush1.msra.mxu0 %v949
  %951 = vmatprep.subr.mxu0 0.0
  %v952 = vand.u32 %v597, 4294901760
  %953 = vmatpush1.msra.mxu0 %v952
  %954 = vmatprep.subr.mxu0 0.0
  %v955 = vand.u32 %v596, 4294901760
  %956 = vmatpush1.msra.mxu0 %v955
  %957 = vmatprep.subr.mxu0 0.0
  %v958 = vand.u32 %v595, 4294901760
  %959 = vmatpush1.msra.mxu0 %v958
  %960 = vmatprep.subr.mxu0 0.0
  %v961 = vand.u32 %v594, 4294901760
  %962 = vmatpush1.msra.mxu0 %v961
  %963 = vmatprep.subr.mxu0 0.0
  %v964 = vand.u32 %v593, 4294901760
  %965 = vmatpush1.msra.mxu0 %v964
  %966 = vmatprep.subr.mxu0 0.0
  %v967 = vand.u32 %v592, 4294901760
  %968 = vmatpush1.msra.mxu0 %v967
  %969 = vmatprep.subr.mxu0 0.0
  %v970 = vand.u32 %v591, 4294901760
  %971 = vmatpush1.msra.mxu0 %v970
  %972 = vmatprep.subr.mxu0 0.0
  %v973 = vand.u32 %v590, 4294901760
  %974 = vmatpush1.msra.mxu0 %v973
  %975 = vmatprep.subr.mxu0 0.0
  %v976 = vand.u32 %v589, 4294901760
  %977 = vmatpush1.msra.mxu0 %v976
  %978 = vmatprep.subr.mxu0 0.0
  %v979 = vand.u32 %v588, 4294901760
  %980 = vmatpush1.msra.mxu0 %v979
  %981 = vmatprep.subr.mxu0 0.0
  %v982 = vand.u32 %v587, 4294901760
  %983 = vmatpush1.msra.mxu0 %v982
  %984 = vmatprep.subr.mxu0 0.0
  %v985 = vand.u32 %v586, 4294901760
  %986 = vmatpush1.msra.mxu0 %v985
  %987 = vmatprep.subr.mxu0 0.0
  %988 = vmatpush2.msra.mxu0 0.0
  %989 = vmatprep.subr.mxu0 0.0
  %990 = vmatpush2.msra.mxu0 0.0
  %991 = vmatprep.subr.mxu0 0.0
  %992 = vmatpush2.msra.mxu0 0.0
  %993 = vmatprep.subr.mxu0 0.0
  %994 = vmatpush2.msra.mxu0 0.0
  %995 = vmatprep.subr.mxu0 0.0
  %996 = vmatpush2.msra.mxu0 0.0
  %997 = vmatprep.subr.mxu0 0.0
  %998 = vmatpush2.msra.mxu0 0.0
  %999 = vmatprep.subr.mxu0 0.0
  %1000 = vmatpush2.msra.mxu0 0.0
  %1001 = vmatprep.subr.mxu0 0.0
  %1002 = vmatpush2.msra.mxu0 0.0
  %1003 = vmatprep.subr.mxu0 0.0
  %1004 = vmatpush2.msra.mxu0 0.0
  %1005 = vmatprep.subr.mxu0 0.0
  %1006 = vmatpush2.msra.mxu0 0.0
  %1007 = vmatprep.subr.mxu0 0.0
  %1008 = vmatpush2.msra.mxu0 0.0
  %1009 = vmatprep.subr.mxu0 0.0
  %1010 = vmatpush2.msra.mxu0 0.0
  %1011 = vmatprep.subr.mxu0 0.0
  %1012 = vmatpush2.msra.mxu0 0.0
  %1013 = vmatprep.subr.mxu0 0.0
  %1014 = vmatpush2.msra.mxu0 0.0
  %1015 = vmatprep.subr.mxu0 0.0
  %1016 = vmatpush2.msra.mxu0 0.0
  %1017 = vmatprep.subr.mxu0 0.0
  %1018 = vmatpush2.msra.mxu0 0.0
  %1019 = vmatprep.mubr.f32.mxu0 0.0
  %v1020 = vand.u32 %v609, 4294901760
  %v1021 = vsub.f32 %v609, %v1020
  %v1022 = vand.u32 %v1021, 4294901760
  %1023 = vmatmul.mubr.f32.gmra.mxu0 %v1022
  %v1024 = vpop.f32.mrf.mxu0
  %v1025 = vadd.f32 %v938, %v1024
  %v1026 = vpop.f32.mrf.mxu0
  %1027 = vdwg.mxu0
  %1028 = vmatprep.subr.mxu0 0.0
  %1029 = vmatpush1.msra.mxu0 0.0
  %1030 = vmatprep.subr.mxu0 0.0
  %1031 = vmatpush1.msra.mxu0 0.0
  %1032 = vmatprep.subr.mxu0 0.0
  %v1033 = vand.u32 %v599, 4294901760
  %v1034 = vsub.f32 %v599, %v1033
  %v1035 = vand.u32 %v1034, 4294901760
  %1036 = vmatpush1.msra.mxu0 %v1035
  %1037 = vmatprep.subr.mxu0 0.0
  %v1038 = vand.u32 %v598, 4294901760
  %v1039 = vsub.f32 %v598, %v1038
  %v1040 = vand.u32 %v1039, 4294901760
  %1041 = vmatpush1.msra.mxu0 %v1040
  %1042 = vmatprep.subr.mxu0 0.0
  %v1043 = vand.u32 %v597, 4294901760
  %v1044 = vsub.f32 %v597, %v1043
  %v1045 = vand.u32 %v1044, 4294901760
  %1046 = vmatpush1.msra.mxu0 %v1045
  %1047 = vmatprep.subr.mxu0 0.0
  %v1048 = vand.u32 %v596, 4294901760
  %v1049 = vsub.f32 %v596, %v1048
  %v1050 = vand.u32 %v1049, 4294901760
  %1051 = vmatpush1.msra.mxu0 %v1050
  %1052 = vmatprep.subr.mxu0 0.0
  %v1053 = vand.u32 %v595, 4294901760
  %v1054 = vsub.f32 %v595, %v1053
  %v1055 = vand.u32 %v1054, 4294901760
  %1056 = vmatpush1.msra.mxu0 %v1055
  %1057 = vmatprep.subr.mxu0 0.0
  %v1058 = vand.u32 %v594, 4294901760
  %v1059 = vsub.f32 %v594, %v1058
  %v1060 = vand.u32 %v1059, 4294901760
  %1061 = vmatpush1.msra.mxu0 %v1060
  %1062 = vmatprep.subr.mxu0 0.0
  %v1063 = vand.u32 %v593, 4294901760
  %v1064 = vsub.f32 %v593, %v1063
  %v1065 = vand.u32 %v1064, 4294901760
  %1066 = vmatpush1.msra.mxu0 %v1065
  %1067 = vmatprep.subr.mxu0 0.0
  %v1068 = vand.u32 %v592, 4294901760
  %v1069 = vsub.f32 %v592, %v1068
  %v1070 = vand.u32 %v1069, 4294901760
  %1071 = vmatpush1.msra.mxu0 %v1070
  %1072 = vmatprep.subr.mxu0 0.0
  %v1073 = vand.u32 %v591, 4294901760
  %v1074 = vsub.f32 %v591, %v1073
  %v1075 = vand.u32 %v1074, 4294901760
  %1076 = vmatpush1.msra.mxu0 %v1075
  %1077 = vmatprep.subr.mxu0 0.0
  %v1078 = vand.u32 %v590, 4294901760
  %v1079 = vsub.f32 %v590, %v1078
  %v1080 = vand.u32 %v1079, 4294901760
  %1081 = vmatpush1.msra.mxu0 %v1080
  %1082 = vmatprep.subr.mxu0 0.0
  %v1083 = vand.u32 %v589, 4294901760
  %v1084 = vsub.f32 %v589, %v1083
  %v1085 = vand.u32 %v1084, 4294901760
  %1086 = vmatpush1.msra.mxu0 %v1085
  %1087 = vmatprep.subr.mxu0 0.0
  %v1088 = vand.u32 %v588, 4294901760
  %v1089 = vsub.f32 %v588, %v1088
  %v1090 = vand.u32 %v1089, 4294901760
  %1091 = vmatpush1.msra.mxu0 %v1090
  %1092 = vmatprep.subr.mxu0 0.0
  %v1093 = vand.u32 %v587, 4294901760
  %v1094 = vsub.f32 %v587, %v1093
  %v1095 = vand.u32 %v1094, 4294901760
  %1096 = vmatpush1.msra.mxu0 %v1095
  %1097 = vmatprep.subr.mxu0 0.0
  %v1098 = vand.u32 %v586, 4294901760
  %v1099 = vsub.f32 %v586, %v1098
  %v1100 = vand.u32 %v1099, 4294901760
  %1101 = vmatpush1.msra.mxu0 %v1100
  %1102 = vmatprep.subr.mxu0 0.0
  %1103 = vmatpush2.msra.mxu0 0.0
  %1104 = vmatprep.subr.mxu0 0.0
  %1105 = vmatpush2.msra.mxu0 0.0
  %1106 = vmatprep.subr.mxu0 0.0
  %1107 = vmatpush2.msra.mxu0 0.0
  %1108 = vmatprep.subr.mxu0 0.0
  %1109 = vmatpush2.msra.mxu0 0.0
  %1110 = vmatprep.subr.mxu0 0.0
  %1111 = vmatpush2.msra.mxu0 0.0
  %1112 = vmatprep.subr.mxu0 0.0
  %1113 = vmatpush2.msra.mxu0 0.0
  %1114 = vmatprep.subr.mxu0 0.0
  %1115 = vmatpush2.msra.mxu0 0.0
  %1116 = vmatprep.subr.mxu0 0.0
  %1117 = vmatpush2.msra.mxu0 0.0
  %1118 = vmatprep.subr.mxu0 0.0
  %1119 = vmatpush2.msra.mxu0 0.0
  %1120 = vmatprep.subr.mxu0 0.0
  %1121 = vmatpush2.msra.mxu0 0.0
  %1122 = vmatprep.subr.mxu0 0.0
  %1123 = vmatpush2.msra.mxu0 0.0
  %1124 = vmatprep.subr.mxu0 0.0
  %1125 = vmatpush2.msra.mxu0 0.0
  %1126 = vmatprep.subr.mxu0 0.0
  %1127 = vmatpush2.msra.mxu0 0.0
  %1128 = vmatprep.subr.mxu0 0.0
  %1129 = vmatpush2.msra.mxu0 0.0
  %1130 = vmatprep.subr.mxu0 0.0
  %1131 = vmatpush2.msra.mxu0 0.0
  %1132 = vmatprep.subr.mxu0 0.0
  %1133 = vmatpush2.msra.mxu0 0.0
  %1134 = vmatprep.mubr.f32.mxu0 0.0
  %v1135 = vand.u32 %v609, 4294901760
  %1136 = vmatmul.mubr.f32.gmra.mxu0 %v1135
  %v1137 = vpop.f32.mrf.mxu0
  %v1138 = vadd.f32 %v1025, %v1137
  %v1139 = vpop.f32.mrf.mxu0
  %1140 = vdwg.mxu0
  %1141 = vmatprep.subr.mxu0 0.0
  %1142 = vmatpush1.msra.mxu0 0.0
  %1143 = vmatprep.subr.mxu0 0.0
  %1144 = vmatpush1.msra.mxu0 0.0
  %1145 = vmatprep.subr.mxu0 0.0
  %v1146 = vand.u32 %v599, 4294901760
  %1147 = vmatpush1.msra.mxu0 %v1146
  %1148 = vmatprep.subr.mxu0 0.0
  %v1149 = vand.u32 %v598, 4294901760
  %1150 = vmatpush1.msra.mxu0 %v1149
  %1151 = vmatprep.subr.mxu0 0.0
  %v1152 = vand.u32 %v597, 4294901760
  %1153 = vmatpush1.msra.mxu0 %v1152
  %1154 = vmatprep.subr.mxu0 0.0
  %v1155 = vand.u32 %v596, 4294901760
  %1156 = vmatpush1.msra.mxu0 %v1155
  %1157 = vmatprep.subr.mxu0 0.0
  %v1158 = vand.u32 %v595, 4294901760
  %1159 = vmatpush1.msra.mxu0 %v1158
  %1160 = vmatprep.subr.mxu0 0.0
  %v1161 = vand.u32 %v594, 4294901760
  %1162 = vmatpush1.msra.mxu0 %v1161
  %1163 = vmatprep.subr.mxu0 0.0
  %v1164 = vand.u32 %v593, 4294901760
  %1165 = vmatpush1.msra.mxu0 %v1164
  %1166 = vmatprep.subr.mxu0 0.0
  %v1167 = vand.u32 %v592, 4294901760
  %1168 = vmatpush1.msra.mxu0 %v1167
  %1169 = vmatprep.subr.mxu0 0.0
  %v1170 = vand.u32 %v591, 4294901760
  %1171 = vmatpush1.msra.mxu0 %v1170
  %1172 = vmatprep.subr.mxu0 0.0
  %v1173 = vand.u32 %v590, 4294901760
  %1174 = vmatpush1.msra.mxu0 %v1173
  %1175 = vmatprep.subr.mxu0 0.0
  %v1176 = vand.u32 %v589, 4294901760
  %1177 = vmatpush1.msra.mxu0 %v1176
  %1178 = vmatprep.subr.mxu0 0.0
  %v1179 = vand.u32 %v588, 4294901760
  %1180 = vmatpush1.msra.mxu0 %v1179
  %1181 = vmatprep.subr.mxu0 0.0
  %v1182 = vand.u32 %v587, 4294901760
  %1183 = vmatpush1.msra.mxu0 %v1182
  %1184 = vmatprep.subr.mxu0 0.0
  %v1185 = vand.u32 %v586, 4294901760
  %1186 = vmatpush1.msra.mxu0 %v1185
  %1187 = vmatprep.subr.mxu0 0.0
  %1188 = vmatpush2.msra.mxu0 0.0
  %1189 = vmatprep.subr.mxu0 0.0
  %1190 = vmatpush2.msra.mxu0 0.0
  %1191 = vmatprep.subr.mxu0 0.0
  %1192 = vmatpush2.msra.mxu0 0.0
  %1193 = vmatprep.subr.mxu0 0.0
  %1194 = vmatpush2.msra.mxu0 0.0
  %1195 = vmatprep.subr.mxu0 0.0
  %1196 = vmatpush2.msra.mxu0 0.0
  %1197 = vmatprep.subr.mxu0 0.0
  %1198 = vmatpush2.msra.mxu0 0.0
  %1199 = vmatprep.subr.mxu0 0.0
  %1200 = vmatpush2.msra.mxu0 0.0
  %1201 = vmatprep.subr.mxu0 0.0
  %1202 = vmatpush2.msra.mxu0 0.0
  %1203 = vmatprep.subr.mxu0 0.0
  %1204 = vmatpush2.msra.mxu0 0.0
  %1205 = vmatprep.subr.mxu0 0.0
  %1206 = vmatpush2.msra.mxu0 0.0
  %1207 = vmatprep.subr.mxu0 0.0
  %1208 = vmatpush2.msra.mxu0 0.0
  %1209 = vmatprep.subr.mxu0 0.0
  %1210 = vmatpush2.msra.mxu0 0.0
  %1211 = vmatprep.subr.mxu0 0.0
  %1212 = vmatpush2.msra.mxu0 0.0
  %1213 = vmatprep.subr.mxu0 0.0
  %1214 = vmatpush2.msra.mxu0 0.0
  %1215 = vmatprep.subr.mxu0 0.0
  %1216 = vmatpush2.msra.mxu0 0.0
  %1217 = vmatprep.subr.mxu0 0.0
  %1218 = vmatpush2.msra.mxu0 0.0
  %1219 = vmatprep.mubr.f32.mxu0 0.0
  %v1220 = vand.u32 %v609, 4294901760
  %1221 = vmatmul.mubr.f32.gmra.mxu0 %v1220
  %v1222 = vpop.f32.mrf.mxu0
  %v1223 = vadd.f32 %v1138, %v1222
  %v1224 = vpop.f32.mrf.mxu0
  %1225 = vdwg.mxu0
  %vm1226 = vcmp.gt.f32.partialorder %v1223, 0.0
  %v1227 = vmul.f32 %v1223, 0.01
  %v1228 = vsel %vm1226, %v1223, %v1227
  %v1229 = vld [vmem:[%s5] sm:$0xff]
  %v1230 = vld [vmem:[%s5 + $0x8] sm:$0xff]
  %v1231 = vld [vmem:[%s5 + $0x10] sm:$0xff]
  %v1232 = vld [vmem:[%s5 + $0x18] sm:$0xff]
  %v1233 = vld [vmem:[%s5 + $0x20] sm:$0xff]
  %v1234 = vld [vmem:[%s5 + $0x28] sm:$0xff]
  %v1235 = vld [vmem:[%s5 + $0x30] sm:$0xff]
  %v1236 = vld [vmem:[%s5 + $0x38] sm:$0xff]
  %v1237 = vld [vmem:[%s6] sm:$0x1]
  %v1239 = vlaneseq
  %v1240 = vshrl.u32 %v1239, 7
  %v1241 = vsub.s32 0, %v1240
  %v1242 = vrot.slane %v1237, %v1241
  %v1245 = vsel %vm42, %v1228, 0
  %1247 = vmatprep.subr.mxu0 0.0
  %1248 = vmatpush1.msra.mxu0 0.0
  %1249 = vmatprep.subr.mxu0 0.0
  %1250 = vmatpush1.msra.mxu0 0.0
  %1251 = vmatprep.subr.mxu0 0.0
  %1252 = vmatpush1.msra.mxu0 0.0
  %1253 = vmatprep.subr.mxu0 0.0
  %1254 = vmatpush1.msra.mxu0 0.0
  %1255 = vmatprep.subr.mxu0 0.0
  %1256 = vmatpush1.msra.mxu0 0.0
  %1257 = vmatprep.subr.mxu0 0.0
  %1258 = vmatpush1.msra.mxu0 0.0
  %1259 = vmatprep.subr.mxu0 0.0
  %1260 = vmatpush1.msra.mxu0 0.0
  %1261 = vmatprep.subr.mxu0 0.0
  %1262 = vmatpush1.msra.mxu0 0.0
  %1263 = vmatprep.subr.mxu0 0.0
  %v1264 = vand.u32 %v1236, 4294901760
  %1265 = vmatpush1.msra.mxu0 %v1264
  %1266 = vmatprep.subr.mxu0 0.0
  %v1267 = vand.u32 %v1235, 4294901760
  %1268 = vmatpush1.msra.mxu0 %v1267
  %1269 = vmatprep.subr.mxu0 0.0
  %v1270 = vand.u32 %v1234, 4294901760
  %1271 = vmatpush1.msra.mxu0 %v1270
  %1272 = vmatprep.subr.mxu0 0.0
  %v1273 = vand.u32 %v1233, 4294901760
  %1274 = vmatpush1.msra.mxu0 %v1273
  %1275 = vmatprep.subr.mxu0 0.0
  %v1276 = vand.u32 %v1232, 4294901760
  %1277 = vmatpush1.msra.mxu0 %v1276
  %1278 = vmatprep.subr.mxu0 0.0
  %v1279 = vand.u32 %v1231, 4294901760
  %1280 = vmatpush1.msra.mxu0 %v1279
  %1281 = vmatprep.subr.mxu0 0.0
  %v1282 = vand.u32 %v1230, 4294901760
  %1283 = vmatpush1.msra.mxu0 %v1282
  %1284 = vmatprep.subr.mxu0 0.0
  %v1285 = vand.u32 %v1229, 4294901760
  %1286 = vmatpush1.msra.mxu0 %v1285
  %1287 = vmatprep.subr.mxu0 0.0
  %1288 = vmatpush2.msra.mxu0 0.0
  %1289 = vmatprep.subr.mxu0 0.0
  %1290 = vmatpush2.msra.mxu0 0.0
  %1291 = vmatprep.subr.mxu0 0.0
  %1292 = vmatpush2.msra.mxu0 0.0
  %1293 = vmatprep.subr.mxu0 0.0
  %1294 = vmatpush2.msra.mxu0 0.0
  %1295 = vmatprep.subr.mxu0 0.0
  %1296 = vmatpush2.msra.mxu0 0.0
  %1297 = vmatprep.subr.mxu0 0.0
  %1298 = vmatpush2.msra.mxu0 0.0
  %1299 = vmatprep.subr.mxu0 0.0
  %1300 = vmatpush2.msra.mxu0 0.0
  %1301 = vmatprep.subr.mxu0 0.0
  %1302 = vmatpush2.msra.mxu0 0.0
  %1303 = vmatprep.subr.mxu0 0.0
  %1304 = vmatpush2.msra.mxu0 0.0
  %1305 = vmatprep.subr.mxu0 0.0
  %1306 = vmatpush2.msra.mxu0 0.0
  %1307 = vmatprep.subr.mxu0 0.0
  %1308 = vmatpush2.msra.mxu0 0.0
  %1309 = vmatprep.subr.mxu0 0.0
  %1310 = vmatpush2.msra.mxu0 0.0
  %1311 = vmatprep.subr.mxu0 0.0
  %1312 = vmatpush2.msra.mxu0 0.0
  %1313 = vmatprep.subr.mxu0 0.0
  %1314 = vmatpush2.msra.mxu0 0.0
  %1315 = vmatprep.subr.mxu0 0.0
  %1316 = vmatpush2.msra.mxu0 0.0
  %1317 = vmatprep.subr.mxu0 0.0
  %1318 = vmatpush2.msra.mxu0 0.0
  %1319 = vmatprep.mubr.f32.mxu0 0.0
  %v1320 = vand.u32 %v1245, 4294901760
  %v1321 = vsub.f32 %v1245, %v1320
  %v1322 = vand.u32 %v1321, 4294901760
  %v1323 = vsub.f32 %v1321, %v1322
  %v1324 = vand.u32 %v1323, 4294901760
  %1325 = vmatmul.mubr.f32.gmra.mxu0 %v1324
  %v1326 = vpop.f32.mrf.mxu0
  %v1327 = vadd.f32 %v1242, %v1326
  %v1328 = vpop.f32.mrf.mxu0
  %1329 = vdwg.mxu0
  %1330 = vmatprep.subr.mxu0 0.0
  %1331 = vmatpush1.msra.mxu0 0.0
  %1332 = vmatprep.subr.mxu0 0.0
  %1333 = vmatpush1.msra.mxu0 0.0
  %1334 = vmatprep.subr.mxu0 0.0
  %1335 = vmatpush1.msra.mxu0 0.0
  %1336 = vmatprep.subr.mxu0 0.0
  %1337 = vmatpush1.msra.mxu0 0.0
  %1338 = vmatprep.subr.mxu0 0.0
  %1339 = vmatpush1.msra.mxu0 0.0
  %1340 = vmatprep.subr.mxu0 0.0
  %1341 = vmatpush1.msra.mxu0 0.0
  %1342 = vmatprep.subr.mxu0 0.0
  %1343 = vmatpush1.msra.mxu0 0.0
  %1344 = vmatprep.subr.mxu0 0.0
  %1345 = vmatpush1.msra.mxu0 0.0
  %1346 = vmatprep.subr.mxu0 0.0
  %v1347 = vand.u32 %v1236, 4294901760
  %v1348 = vsub.f32 %v1236, %v1347
  %v1349 = vand.u32 %v1348, 4294901760
  %v1350 = vsub.f32 %v1348, %v1349
  %v1351 = vand.u32 %v1350, 4294901760
  %1352 = vmatpush1.msra.mxu0 %v1351
  %1353 = vmatprep.subr.mxu0 0.0
  %v1354 = vand.u32 %v1235, 4294901760
  %v1355 = vsub.f32 %v1235, %v1354
  %v1356 = vand.u32 %v1355, 4294901760
  %v1357 = vsub.f32 %v1355, %v1356
  %v1358 = vand.u32 %v1357, 4294901760
  %1359 = vmatpush1.msra.mxu0 %v1358
  %1360 = vmatprep.subr.mxu0 0.0
  %v1361 = vand.u32 %v1234, 4294901760
  %v1362 = vsub.f32 %v1234, %v1361
  %v1363 = vand.u32 %v1362, 4294901760
  %v1364 = vsub.f32 %v1362, %v1363
  %v1365 = vand.u32 %v1364, 4294901760
  %1366 = vmatpush1.msra.mxu0 %v1365
  %1367 = vmatprep.subr.mxu0 0.0
  %v1368 = vand.u32 %v1233, 4294901760
  %v1369 = vsub.f32 %v1233, %v1368
  %v1370 = vand.u32 %v1369, 4294901760
  %v1371 = vsub.f32 %v1369, %v1370
  %v1372 = vand.u32 %v1371, 4294901760
  %1373 = vmatpush1.msra.mxu0 %v1372
  %1374 = vmatprep.subr.mxu0 0.0
  %v1375 = vand.u32 %v1232, 4294901760
  %v1376 = vsub.f32 %v1232, %v1375
  %v1377 = vand.u32 %v1376, 4294901760
  %v1378 = vsub.f32 %v1376, %v1377
  %v1379 = vand.u32 %v1378, 4294901760
  %1380 = vmatpush1.msra.mxu0 %v1379
  %1381 = vmatprep.subr.mxu0 0.0
  %v1382 = vand.u32 %v1231, 4294901760
  %v1383 = vsub.f32 %v1231, %v1382
  %v1384 = vand.u32 %v1383, 4294901760
  %v1385 = vsub.f32 %v1383, %v1384
  %v1386 = vand.u32 %v1385, 4294901760
  %1387 = vmatpush1.msra.mxu0 %v1386
  %1388 = vmatprep.subr.mxu0 0.0
  %v1389 = vand.u32 %v1230, 4294901760
  %v1390 = vsub.f32 %v1230, %v1389
  %v1391 = vand.u32 %v1390, 4294901760
  %v1392 = vsub.f32 %v1390, %v1391
  %v1393 = vand.u32 %v1392, 4294901760
  %1394 = vmatpush1.msra.mxu0 %v1393
  %1395 = vmatprep.subr.mxu0 0.0
  %v1396 = vand.u32 %v1229, 4294901760
  %v1397 = vsub.f32 %v1229, %v1396
  %v1398 = vand.u32 %v1397, 4294901760
  %v1399 = vsub.f32 %v1397, %v1398
  %v1400 = vand.u32 %v1399, 4294901760
  %1401 = vmatpush1.msra.mxu0 %v1400
  %1402 = vmatprep.subr.mxu0 0.0
  %1403 = vmatpush2.msra.mxu0 0.0
  %1404 = vmatprep.subr.mxu0 0.0
  %1405 = vmatpush2.msra.mxu0 0.0
  %1406 = vmatprep.subr.mxu0 0.0
  %1407 = vmatpush2.msra.mxu0 0.0
  %1408 = vmatprep.subr.mxu0 0.0
  %1409 = vmatpush2.msra.mxu0 0.0
  %1410 = vmatprep.subr.mxu0 0.0
  %1411 = vmatpush2.msra.mxu0 0.0
  %1412 = vmatprep.subr.mxu0 0.0
  %1413 = vmatpush2.msra.mxu0 0.0
  %1414 = vmatprep.subr.mxu0 0.0
  %1415 = vmatpush2.msra.mxu0 0.0
  %1416 = vmatprep.subr.mxu0 0.0
  %1417 = vmatpush2.msra.mxu0 0.0
  %1418 = vmatprep.subr.mxu0 0.0
  %1419 = vmatpush2.msra.mxu0 0.0
  %1420 = vmatprep.subr.mxu0 0.0
  %1421 = vmatpush2.msra.mxu0 0.0
  %1422 = vmatprep.subr.mxu0 0.0
  %1423 = vmatpush2.msra.mxu0 0.0
  %1424 = vmatprep.subr.mxu0 0.0
  %1425 = vmatpush2.msra.mxu0 0.0
  %1426 = vmatprep.subr.mxu0 0.0
  %1427 = vmatpush2.msra.mxu0 0.0
  %1428 = vmatprep.subr.mxu0 0.0
  %1429 = vmatpush2.msra.mxu0 0.0
  %1430 = vmatprep.subr.mxu0 0.0
  %1431 = vmatpush2.msra.mxu0 0.0
  %1432 = vmatprep.subr.mxu0 0.0
  %1433 = vmatpush2.msra.mxu0 0.0
  %1434 = vmatprep.mubr.f32.mxu0 0.0
  %v1435 = vand.u32 %v1245, 4294901760
  %1436 = vmatmul.mubr.f32.gmra.mxu0 %v1435
  %v1437 = vpop.f32.mrf.mxu0
  %v1438 = vadd.f32 %v1327, %v1437
  %v1439 = vpop.f32.mrf.mxu0
  %1440 = vdwg.mxu0
  %1441 = vmatprep.subr.mxu0 0.0
  %1442 = vmatpush1.msra.mxu0 0.0
  %1443 = vmatprep.subr.mxu0 0.0
  %1444 = vmatpush1.msra.mxu0 0.0
  %1445 = vmatprep.subr.mxu0 0.0
  %1446 = vmatpush1.msra.mxu0 0.0
  %1447 = vmatprep.subr.mxu0 0.0
  %1448 = vmatpush1.msra.mxu0 0.0
  %1449 = vmatprep.subr.mxu0 0.0
  %1450 = vmatpush1.msra.mxu0 0.0
  %1451 = vmatprep.subr.mxu0 0.0
  %1452 = vmatpush1.msra.mxu0 0.0
  %1453 = vmatprep.subr.mxu0 0.0
  %1454 = vmatpush1.msra.mxu0 0.0
  %1455 = vmatprep.subr.mxu0 0.0
  %1456 = vmatpush1.msra.mxu0 0.0
  %1457 = vmatprep.subr.mxu0 0.0
  %v1458 = vand.u32 %v1236, 4294901760
  %v1459 = vsub.f32 %v1236, %v1458
  %1460 = vmatpush1.msra.mxu0 %v1459
  %1461 = vmatprep.subr.mxu0 0.0
  %v1462 = vand.u32 %v1235, 4294901760
  %v1463 = vsub.f32 %v1235, %v1462
  %1464 = vmatpush1.msra.mxu0 %v1463
  %1465 = vmatprep.subr.mxu0 0.0
  %v1466 = vand.u32 %v1234, 4294901760
  %v1467 = vsub.f32 %v1234, %v1466
  %1468 = vmatpush1.msra.mxu0 %v1467
  %1469 = vmatprep.subr.mxu0 0.0
  %v1470 = vand.u32 %v1233, 4294901760
  %v1471 = vsub.f32 %v1233, %v1470
  %1472 = vmatpush1.msra.mxu0 %v1471
  %1473 = vmatprep.subr.mxu0 0.0
  %v1474 = vand.u32 %v1232, 4294901760
  %v1475 = vsub.f32 %v1232, %v1474
  %1476 = vmatpush1.msra.mxu0 %v1475
  %1477 = vmatprep.subr.mxu0 0.0
  %v1478 = vand.u32 %v1231, 4294901760
  %v1479 = vsub.f32 %v1231, %v1478
  %1480 = vmatpush1.msra.mxu0 %v1479
  %1481 = vmatprep.subr.mxu0 0.0
  %v1482 = vand.u32 %v1230, 4294901760
  %v1483 = vsub.f32 %v1230, %v1482
  %1484 = vmatpush1.msra.mxu0 %v1483
  %1485 = vmatprep.subr.mxu0 0.0
  %v1486 = vand.u32 %v1229, 4294901760
  %v1487 = vsub.f32 %v1229, %v1486
  %1488 = vmatpush1.msra.mxu0 %v1487
  %1489 = vmatprep.subr.mxu0 0.0
  %1490 = vmatpush2.msra.mxu0 0.0
  %1491 = vmatprep.subr.mxu0 0.0
  %1492 = vmatpush2.msra.mxu0 0.0
  %1493 = vmatprep.subr.mxu0 0.0
  %1494 = vmatpush2.msra.mxu0 0.0
  %1495 = vmatprep.subr.mxu0 0.0
  %1496 = vmatpush2.msra.mxu0 0.0
  %1497 = vmatprep.subr.mxu0 0.0
  %1498 = vmatpush2.msra.mxu0 0.0
  %1499 = vmatprep.subr.mxu0 0.0
  %1500 = vmatpush2.msra.mxu0 0.0
  %1501 = vmatprep.subr.mxu0 0.0
  %1502 = vmatpush2.msra.mxu0 0.0
  %1503 = vmatprep.subr.mxu0 0.0
  %1504 = vmatpush2.msra.mxu0 0.0
  %1505 = vmatprep.subr.mxu0 0.0
  %1506 = vmatpush2.msra.mxu0 0.0
  %1507 = vmatprep.subr.mxu0 0.0
  %1508 = vmatpush2.msra.mxu0 0.0
  %1509 = vmatprep.subr.mxu0 0.0
  %1510 = vmatpush2.msra.mxu0 0.0
  %1511 = vmatprep.subr.mxu0 0.0
  %1512 = vmatpush2.msra.mxu0 0.0
  %1513 = vmatprep.subr.mxu0 0.0
  %1514 = vmatpush2.msra.mxu0 0.0
  %1515 = vmatprep.subr.mxu0 0.0
  %1516 = vmatpush2.msra.mxu0 0.0
  %1517 = vmatprep.subr.mxu0 0.0
  %1518 = vmatpush2.msra.mxu0 0.0
  %1519 = vmatprep.subr.mxu0 0.0
  %1520 = vmatpush2.msra.mxu0 0.0
  %1521 = vmatprep.mubr.f32.mxu0 0.0
  %v1522 = vand.u32 %v1245, 4294901760
  %v1523 = vsub.f32 %v1245, %v1522
  %1524 = vmatmul.mubr.f32.gmra.mxu0 %v1523
  %v1525 = vpop.f32.mrf.mxu0
  %v1526 = vadd.f32 %v1438, %v1525
  %v1527 = vpop.f32.mrf.mxu0
  %1528 = vdwg.mxu0
  %1529 = vmatprep.subr.mxu0 0.0
  %1530 = vmatpush1.msra.mxu0 0.0
  %1531 = vmatprep.subr.mxu0 0.0
  %1532 = vmatpush1.msra.mxu0 0.0
  %1533 = vmatprep.subr.mxu0 0.0
  %1534 = vmatpush1.msra.mxu0 0.0
  %1535 = vmatprep.subr.mxu0 0.0
  %1536 = vmatpush1.msra.mxu0 0.0
  %1537 = vmatprep.subr.mxu0 0.0
  %1538 = vmatpush1.msra.mxu0 0.0
  %1539 = vmatprep.subr.mxu0 0.0
  %1540 = vmatpush1.msra.mxu0 0.0
  %1541 = vmatprep.subr.mxu0 0.0
  %1542 = vmatpush1.msra.mxu0 0.0
  %1543 = vmatprep.subr.mxu0 0.0
  %1544 = vmatpush1.msra.mxu0 0.0
  %1545 = vmatprep.subr.mxu0 0.0
  %v1546 = vand.u32 %v1236, 4294901760
  %1547 = vmatpush1.msra.mxu0 %v1546
  %1548 = vmatprep.subr.mxu0 0.0
  %v1549 = vand.u32 %v1235, 4294901760
  %1550 = vmatpush1.msra.mxu0 %v1549
  %1551 = vmatprep.subr.mxu0 0.0
  %v1552 = vand.u32 %v1234, 4294901760
  %1553 = vmatpush1.msra.mxu0 %v1552
  %1554 = vmatprep.subr.mxu0 0.0
  %v1555 = vand.u32 %v1233, 4294901760
  %1556 = vmatpush1.msra.mxu0 %v1555
  %1557 = vmatprep.subr.mxu0 0.0
  %v1558 = vand.u32 %v1232, 4294901760
  %1559 = vmatpush1.msra.mxu0 %v1558
  %1560 = vmatprep.subr.mxu0 0.0
  %v1561 = vand.u32 %v1231, 4294901760
  %1562 = vmatpush1.msra.mxu0 %v1561
  %1563 = vmatprep.subr.mxu0 0.0
  %v1564 = vand.u32 %v1230, 4294901760
  %1565 = vmatpush1.msra.mxu0 %v1564
  %1566 = vmatprep.subr.mxu0 0.0
  %v1567 = vand.u32 %v1229, 4294901760
  %1568 = vmatpush1.msra.mxu0 %v1567
  %1569 = vmatprep.subr.mxu0 0.0
  %1570 = vmatpush2.msra.mxu0 0.0
  %1571 = vmatprep.subr.mxu0 0.0
  %1572 = vmatpush2.msra.mxu0 0.0
  %1573 = vmatprep.subr.mxu0 0.0
  %1574 = vmatpush2.msra.mxu0 0.0
  %1575 = vmatprep.subr.mxu0 0.0
  %1576 = vmatpush2.msra.mxu0 0.0
  %1577 = vmatprep.subr.mxu0 0.0
  %1578 = vmatpush2.msra.mxu0 0.0
  %1579 = vmatprep.subr.mxu0 0.0
  %1580 = vmatpush2.msra.mxu0 0.0
  %1581 = vmatprep.subr.mxu0 0.0
  %1582 = vmatpush2.msra.mxu0 0.0
  %1583 = vmatprep.subr.mxu0 0.0
  %1584 = vmatpush2.msra.mxu0 0.0
  %1585 = vmatprep.subr.mxu0 0.0
  %1586 = vmatpush2.msra.mxu0 0.0
  %1587 = vmatprep.subr.mxu0 0.0
  %1588 = vmatpush2.msra.mxu0 0.0
  %1589 = vmatprep.subr.mxu0 0.0
  %1590 = vmatpush2.msra.mxu0 0.0
  %1591 = vmatprep.subr.mxu0 0.0
  %1592 = vmatpush2.msra.mxu0 0.0
  %1593 = vmatprep.subr.mxu0 0.0
  %1594 = vmatpush2.msra.mxu0 0.0
  %1595 = vmatprep.subr.mxu0 0.0
  %1596 = vmatpush2.msra.mxu0 0.0
  %1597 = vmatprep.subr.mxu0 0.0
  %1598 = vmatpush2.msra.mxu0 0.0
  %1599 = vmatprep.subr.mxu0 0.0
  %1600 = vmatpush2.msra.mxu0 0.0
  %1601 = vmatprep.mubr.f32.mxu0 0.0
  %v1602 = vand.u32 %v1245, 4294901760
  %v1603 = vsub.f32 %v1245, %v1602
  %v1604 = vand.u32 %v1603, 4294901760
  %1605 = vmatmul.mubr.f32.gmra.mxu0 %v1604
  %v1606 = vpop.f32.mrf.mxu0
  %v1607 = vadd.f32 %v1526, %v1606
  %v1608 = vpop.f32.mrf.mxu0
  %1609 = vdwg.mxu0
  %1610 = vmatprep.subr.mxu0 0.0
  %1611 = vmatpush1.msra.mxu0 0.0
  %1612 = vmatprep.subr.mxu0 0.0
  %1613 = vmatpush1.msra.mxu0 0.0
  %1614 = vmatprep.subr.mxu0 0.0
  %1615 = vmatpush1.msra.mxu0 0.0
  %1616 = vmatprep.subr.mxu0 0.0
  %1617 = vmatpush1.msra.mxu0 0.0
  %1618 = vmatprep.subr.mxu0 0.0
  %1619 = vmatpush1.msra.mxu0 0.0
  %1620 = vmatprep.subr.mxu0 0.0
  %1621 = vmatpush1.msra.mxu0 0.0
  %1622 = vmatprep.subr.mxu0 0.0
  %1623 = vmatpush1.msra.mxu0 0.0
  %1624 = vmatprep.subr.mxu0 0.0
  %1625 = vmatpush1.msra.mxu0 0.0
  %1626 = vmatprep.subr.mxu0 0.0
  %v1627 = vand.u32 %v1236, 4294901760
  %v1628 = vsub.f32 %v1236, %v1627
  %v1629 = vand.u32 %v1628, 4294901760
  %1630 = vmatpush1.msra.mxu0 %v1629
  %1631 = vmatprep.subr.mxu0 0.0
  %v1632 = vand.u32 %v1235, 4294901760
  %v1633 = vsub.f32 %v1235, %v1632
  %v1634 = vand.u32 %v1633, 4294901760
  %1635 = vmatpush1.msra.mxu0 %v1634
  %1636 = vmatprep.subr.mxu0 0.0
  %v1637 = vand.u32 %v1234, 4294901760
  %v1638 = vsub.f32 %v1234, %v1637
  %v1639 = vand.u32 %v1638, 4294901760
  %1640 = vmatpush1.msra.mxu0 %v1639
  %1641 = vmatprep.subr.mxu0 0.0
  %v1642 = vand.u32 %v1233, 4294901760
  %v1643 = vsub.f32 %v1233, %v1642
  %v1644 = vand.u32 %v1643, 4294901760
  %1645 = vmatpush1.msra.mxu0 %v1644
  %1646 = vmatprep.subr.mxu0 0.0
  %v1647 = vand.u32 %v1232, 4294901760
  %v1648 = vsub.f32 %v1232, %v1647
  %v1649 = vand.u32 %v1648, 4294901760
  %1650 = vmatpush1.msra.mxu0 %v1649
  %1651 = vmatprep.subr.mxu0 0.0
  %v1652 = vand.u32 %v1231, 4294901760
  %v1653 = vsub.f32 %v1231, %v1652
  %v1654 = vand.u32 %v1653, 4294901760
  %1655 = vmatpush1.msra.mxu0 %v1654
  %1656 = vmatprep.subr.mxu0 0.0
  %v1657 = vand.u32 %v1230, 4294901760
  %v1658 = vsub.f32 %v1230, %v1657
  %v1659 = vand.u32 %v1658, 4294901760
  %1660 = vmatpush1.msra.mxu0 %v1659
  %1661 = vmatprep.subr.mxu0 0.0
  %v1662 = vand.u32 %v1229, 4294901760
  %v1663 = vsub.f32 %v1229, %v1662
  %v1664 = vand.u32 %v1663, 4294901760
  %1665 = vmatpush1.msra.mxu0 %v1664
  %1666 = vmatprep.subr.mxu0 0.0
  %1667 = vmatpush2.msra.mxu0 0.0
  %1668 = vmatprep.subr.mxu0 0.0
  %1669 = vmatpush2.msra.mxu0 0.0
  %1670 = vmatprep.subr.mxu0 0.0
  %1671 = vmatpush2.msra.mxu0 0.0
  %1672 = vmatprep.subr.mxu0 0.0
  %1673 = vmatpush2.msra.mxu0 0.0
  %1674 = vmatprep.subr.mxu0 0.0
  %1675 = vmatpush2.msra.mxu0 0.0
  %1676 = vmatprep.subr.mxu0 0.0
  %1677 = vmatpush2.msra.mxu0 0.0
  %1678 = vmatprep.subr.mxu0 0.0
  %1679 = vmatpush2.msra.mxu0 0.0
  %1680 = vmatprep.subr.mxu0 0.0
  %1681 = vmatpush2.msra.mxu0 0.0
  %1682 = vmatprep.subr.mxu0 0.0
  %1683 = vmatpush2.msra.mxu0 0.0
  %1684 = vmatprep.subr.mxu0 0.0
  %1685 = vmatpush2.msra.mxu0 0.0
  %1686 = vmatprep.subr.mxu0 0.0
  %1687 = vmatpush2.msra.mxu0 0.0
  %1688 = vmatprep.subr.mxu0 0.0
  %1689 = vmatpush2.msra.mxu0 0.0
  %1690 = vmatprep.subr.mxu0 0.0
  %1691 = vmatpush2.msra.mxu0 0.0
  %1692 = vmatprep.subr.mxu0 0.0
  %1693 = vmatpush2.msra.mxu0 0.0
  %1694 = vmatprep.subr.mxu0 0.0
  %1695 = vmatpush2.msra.mxu0 0.0
  %1696 = vmatprep.subr.mxu0 0.0
  %1697 = vmatpush2.msra.mxu0 0.0
  %1698 = vmatprep.mubr.f32.mxu0 0.0
  %v1699 = vand.u32 %v1245, 4294901760
  %1700 = vmatmul.mubr.f32.gmra.mxu0 %v1699
  %v1701 = vpop.f32.mrf.mxu0
  %v1702 = vadd.f32 %v1607, %v1701
  %v1703 = vpop.f32.mrf.mxu0
  %1704 = vdwg.mxu0
  %1705 = vmatprep.subr.mxu0 0.0
  %1706 = vmatpush1.msra.mxu0 0.0
  %1707 = vmatprep.subr.mxu0 0.0
  %1708 = vmatpush1.msra.mxu0 0.0
  %1709 = vmatprep.subr.mxu0 0.0
  %1710 = vmatpush1.msra.mxu0 0.0
  %1711 = vmatprep.subr.mxu0 0.0
  %1712 = vmatpush1.msra.mxu0 0.0
  %1713 = vmatprep.subr.mxu0 0.0
  %1714 = vmatpush1.msra.mxu0 0.0
  %1715 = vmatprep.subr.mxu0 0.0
  %1716 = vmatpush1.msra.mxu0 0.0
  %1717 = vmatprep.subr.mxu0 0.0
  %1718 = vmatpush1.msra.mxu0 0.0
  %1719 = vmatprep.subr.mxu0 0.0
  %1720 = vmatpush1.msra.mxu0 0.0
  %1721 = vmatprep.subr.mxu0 0.0
  %v1722 = vand.u32 %v1236, 4294901760
  %1723 = vmatpush1.msra.mxu0 %v1722
  %1724 = vmatprep.subr.mxu0 0.0
  %v1725 = vand.u32 %v1235, 4294901760
  %1726 = vmatpush1.msra.mxu0 %v1725
  %1727 = vmatprep.subr.mxu0 0.0
  %v1728 = vand.u32 %v1234, 4294901760
  %1729 = vmatpush1.msra.mxu0 %v1728
  %1730 = vmatprep.subr.mxu0 0.0
  %v1731 = vand.u32 %v1233, 4294901760
  %1732 = vmatpush1.msra.mxu0 %v1731
  %1733 = vmatprep.subr.mxu0 0.0
  %v1734 = vand.u32 %v1232, 4294901760
  %1735 = vmatpush1.msra.mxu0 %v1734
  %1736 = vmatprep.subr.mxu0 0.0
  %v1737 = vand.u32 %v1231, 4294901760
  %1738 = vmatpush1.msra.mxu0 %v1737
  %1739 = vmatprep.subr.mxu0 0.0
  %v1740 = vand.u32 %v1230, 4294901760
  %1741 = vmatpush1.msra.mxu0 %v1740
  %1742 = vmatprep.subr.mxu0 0.0
  %v1743 = vand.u32 %v1229, 4294901760
  %1744 = vmatpush1.msra.mxu0 %v1743
  %1745 = vmatprep.subr.mxu0 0.0
  %1746 = vmatpush2.msra.mxu0 0.0
  %1747 = vmatprep.subr.mxu0 0.0
  %1748 = vmatpush2.msra.mxu0 0.0
  %1749 = vmatprep.subr.mxu0 0.0
  %1750 = vmatpush2.msra.mxu0 0.0
  %1751 = vmatprep.subr.mxu0 0.0
  %1752 = vmatpush2.msra.mxu0 0.0
  %1753 = vmatprep.subr.mxu0 0.0
  %1754 = vmatpush2.msra.mxu0 0.0
  %1755 = vmatprep.subr.mxu0 0.0
  %1756 = vmatpush2.msra.mxu0 0.0
  %1757 = vmatprep.subr.mxu0 0.0
  %1758 = vmatpush2.msra.mxu0 0.0
  %1759 = vmatprep.subr.mxu0 0.0
  %1760 = vmatpush2.msra.mxu0 0.0
  %1761 = vmatprep.subr.mxu0 0.0
  %1762 = vmatpush2.msra.mxu0 0.0
  %1763 = vmatprep.subr.mxu0 0.0
  %1764 = vmatpush2.msra.mxu0 0.0
  %1765 = vmatprep.subr.mxu0 0.0
  %1766 = vmatpush2.msra.mxu0 0.0
  %1767 = vmatprep.subr.mxu0 0.0
  %1768 = vmatpush2.msra.mxu0 0.0
  %1769 = vmatprep.subr.mxu0 0.0
  %1770 = vmatpush2.msra.mxu0 0.0
  %1771 = vmatprep.subr.mxu0 0.0
  %1772 = vmatpush2.msra.mxu0 0.0
  %1773 = vmatprep.subr.mxu0 0.0
  %1774 = vmatpush2.msra.mxu0 0.0
  %1775 = vmatprep.subr.mxu0 0.0
  %1776 = vmatpush2.msra.mxu0 0.0
  %1777 = vmatprep.mubr.f32.mxu0 0.0
  %v1778 = vand.u32 %v1245, 4294901760
  %1779 = vmatmul.mubr.f32.gmra.mxu0 %v1778
  %v1780 = vpop.f32.mrf.mxu0
  %v1781 = vadd.f32 %v1702, %v1780
  %v1782 = vpop.f32.mrf.mxu0
  %1783 = vdwg.mxu0
  %v1784 = vmax.f32 %v1781, 0.0
  %1785 = vst [vmem:[%s7] sm:$0xff] %v1784
  // Predicated region
  $region30: #{conv1d_forward.1} parent=0 // pred_check
    _
  $region31: #{conv1d_forward.1} parent=0 // pred_check_branch
    %1787 = sbr.rel (0) target = $region33
  $region32: #{conv1d_forward.1} parent=0 // pred_region
    _
  $region33: #{conv1d_forward.1} parent=0 // pred_fallthru
    _
  // Predicated region
  $region34: #{conv1d_forward.1} parent=0 // pred_check
    _
  $region35: #{conv1d_forward.1} parent=0 // pred_check_branch
    %1789 = sbr.rel (0) target = $region37
  $region36: #{conv1d_forward.1} parent=0 // pred_region
    _
  $region37: #{conv1d_forward.1} parent=0 // pred_fallthru
    _

</llo_original>
